<compile_context>
chip_gen: v5e
topology: v5e:2x2
jax: 0.10.0
libtpu: 0.0.40
codegen_flags: <defaults>
</compile_context>

<pallas_src>
import functools
import math

import jax
import jax.numpy as jnp
from jax.experimental import pallas as pl
from jax.experimental.pallas import tpu as pltpu


# ----------------------------------------------------------------------------
# Kernel
# ----------------------------------------------------------------------------
def _ipe_kernel(x_ref, out_ref, *, lo, nf):
    """x_ref: (9, tile) packed rays; out_ref: (2, 3*nf, tile) encodings."""
    x = x_ref[...]                       # (9, tile) f32
    o = x[0:3, :]                        # (3, tile)
    d = x[3:6, :]                        # (3, tile)
    r = x[6:7, :]                        # (1, tile)
    t0 = x[7:8, :]                       # (1, tile)
    t1 = x[8:9, :]                       # (1, tile)

    eps = jnp.float32(1e-10)

    # Cheap per-ray statistics live on (1, tile) slabs (full lane occupancy).
    t_mu = (t0 + t1) * 0.5
    t_delta = (t1 - t0) * 0.5
    t_mu2 = t_mu * t_mu
    t_d2 = t_delta * t_delta
    t_d4 = t_d2 * t_d2
    inv_denom = 1.0 / (3.0 * t_mu2 + t_d2 + eps)          # one reciprocal, reused 3x

    mu_t = t_mu + 2.0 * t_mu * t_d2 * inv_denom
    var_t = t_d2 / 3.0 - (4.0 / 15.0) * (
        t_d4 * (12.0 * t_mu2 - t_d2) * (inv_denom * inv_denom)
    )
    var_r = (r * r) * (t_mu2 / 4.0 + (5.0 / 12.0) * t_d2
                       - (4.0 / 15.0) * t_d4 * inv_denom)

    mu = o + mu_t * d                                      # (3, tile)
    dd = d * d                                             # (3, tile)
    # Sublane adds instead of a cross-lane reduction.
    inv_mag = 1.0 / (dd[0:1, :] + dd[1:2, :] + dd[2:3, :] + eps)   # (1, tile)
    cov_diag = var_t * dd + var_r * (1.0 - dd * inv_mag)   # (3, tile)

    # Frequency expansion: row (f*3 + c) = 4**(lo+f) * x[c].  Compile-time
    # Python scalars -> plain VPU broadcast multiplies, then one sublane
    # concatenate.  No MXU, no streamed W matrix.
    freqs = [4.0 ** float(lo + f) for f in range(nf)]      # exact powers of two
    mu_gamma = jnp.concatenate([mu * fq for fq in freqs], axis=0)        # (3F, tile)
    cov_gamma = jnp.concatenate([cov_diag * fq for fq in freqs], axis=0)  # (3F, tile)

    damp = jnp.exp(-0.5 * cov_gamma)                       # (3F, tile)

    # Direct slab stores: sin-half and cos-half each land at an aligned
    # (3F, tile) block -- no concatenate / extra VMEM temp on the store path.
    out_ref[0] = (jnp.sin(mu_gamma) * damp).astype(out_ref.dtype)
    out_ref[1] = (jnp.cos(mu_gamma) * damp).astype(out_ref.dtype)


# ----------------------------------------------------------------------------
# Wrapper
# ----------------------------------------------------------------------------
def integrated_positional_encoder(o, d, r, t0, t1, freq_range=(-5, 5),
                                  tile=4096, out_dtype=jnp.float32):
    """o, d: [..., 3]; r, t0, t1: [..., 1]. Returns [..., 3*2*(hi-lo)]."""
    lo, hi = freq_range
    nf = hi - lo
    nf3 = 3 * nf
    out_dim = 2 * nf3
    batch_shape = o.shape[:-1]
    M = int(math.prod(batch_shape))

    # Pack the five ray inputs into one (M, 9) slab: [o | d | r | t0 | t1].
    x = jnp.concatenate(
        [o.reshape(M, 3), d.reshape(M, 3),
         r.reshape(M, 1), t0.reshape(M, 1), t1.reshape(M, 1)],
        axis=-1,
    ).astype(jnp.float32)                                   # (M, 9)

    # Lane tile: multiple of 128 rays, thousands of rays for real workloads,
    # shrunk for tiny inputs.  (tile=4096 keeps double-buffered blocks well
    # under the 32 MiB scoped VMEM default on all generations incl. v7x.)
    m128 = ((M + 127) // 128) * 128
    tile = max(128, min(int(tile), m128))
    tile = (tile // 128) * 128
    Mp = ((M + tile - 1) // tile) * tile
    if Mp > M:
        x = jnp.pad(x, ((0, Mp - M), (0, 0)))               # zero rows are benign (eps guards)
    xt = x.T                                                 # (9, Mp): rays on the lane axis

    grid = (Mp // tile,)

    out = pl.pallas_call(
        functools.partial(_ipe_kernel, lo=lo, nf=nf),
        out_shape=jax.ShapeDtypeStruct((2, nf3, Mp), out_dtype),
        grid_spec=pltpu.PrefetchScalarGridSpec(
            num_scalar_prefetch=0,
            grid=grid,
            in_specs=[pl.BlockSpec((9, tile), lambda i: (0, i))],
            out_specs=pl.BlockSpec((2, nf3, tile), lambda i: (0, 0, i)),
        ),
        compiler_params=pltpu.CompilerParams(
            dimension_semantics=("parallel",),
        ),
    )(xt)

    # (2, 3F, Mp) -> (M, 2*3F) with column index = part*3F + f*3 + c.
    enc = jnp.transpose(out, (2, 0, 1)).reshape(Mp, out_dim)[:M]
    return enc.reshape(*batch_shape, out_dim)


# ----------------------------------------------------------------------------
# Pure-JAX reference (mirrors the PyTorch forward exactly)
# ----------------------------------------------------------------------------
def _reference(o, d, r, t0, t1, freq_range=(-5, 5)):
    lo, hi = freq_range
    freqs = jnp.power(4.0, jnp.arange(lo, hi, dtype=jnp.float32)).reshape(1, 1, -1, 1)
    t_mu = (t0 + t1) / 2
    t_delta = (t1 - t0) / 2
    denom = 3 * t_mu**2 + t_delta**2 + 1e-10
    mu_t = t_mu + 2 * t_mu * t_delta**2 / denom
    var_t = t_delta**2 / 3 - 4 / 15 * (t_delta**4 * (12 * t_mu**2 - t_delta**2) / denom**2)
    var_r = r**2 * (t_mu**2 / 4 + 5 / 12 * t_delta**2 - 4 / 15 * t_delta**4 / denom)
    mu = o + mu_t * d
    dd = d**2
    mag = jnp.sum(dd, axis=-1, keepdims=True) + 1e-10
    cov_diag = var_t * dd + var_r * (1 - dd / mag)
    cov_g = (freqs * cov_diag[..., None, :]).reshape(*cov_diag.shape[:-1], -1)
    mu_g = (freqs * mu[..., None, :]).reshape(*mu.shape[:-1], -1)
    return jnp.concatenate(
        [jnp.sin(mu_g) * jnp.exp(-cov_g / 2), jnp.cos(mu_g) * jnp.exp(-cov_g / 2)],
        axis=-1,
    )


# ----------------------------------------------------------------------------
if __name__ == "__main__":
    key = jax.random.PRNGKey(0)
    k1, k2, k3, k4, k5 = jax.random.split(key, 5)

    B, N = 2, 8  # rays x samples  -> M = 16 rows
    o = jax.random.normal(k1, (B, N, 3), dtype=jnp.float32)
    d = jax.random.normal(k2, (B, N, 3), dtype=jnp.float32)
    r = jax.random.uniform(k3, (B, N, 1), dtype=jnp.float32, minval=1e-3, maxval=1e-2)
    t0 = jax.random.uniform(k4, (B, N, 1), dtype=jnp.float32, minval=0.1, maxval=1.0)
    t1 = t0 + jax.random.uniform(k5, (B, N, 1), dtype=jnp.float32, minval=0.1, maxval=1.0)

    out = integrated_positional_encoder(o, d, r, t0, t1)
    out = jax.block_until_ready(out)

    ref = _reference(o, d, r, t0, t1)
    assert out.shape == (B, N, 60), out.shape
    assert jnp.allclose(out, ref, rtol=1e-4, atol=2e-4), "mismatch vs reference"

    print("KERNEL_OK")
</pallas_src>

<mosaic_0001>
module attributes {stable_mosaic.version = 11 : i64} {
  func.func @_ipe_kernel(%arg0: i32, %arg1: memref<9x128xf32, #tpu.memory_space<vmem>>, %arg2: memref<2x30x128xf32, #tpu.memory_space<vmem>>) attributes {dimension_semantics = [#tpu.dimension_semantics<parallel>], iteration_bounds = array<i64: 1>, scalar_prefetch = 0 : i64, scratch_operands = 0 : i64, tpu.core_type = #tpu.core_type<tc>, window_params = [{transform_indices = @transform_0, window_bounds = array<i64: 9, 128>}, {transform_indices = @transform_1, window_bounds = array<i64: 2, 30, 128>}]} {
    %c0 = arith.constant 0 : index
    %c0_0 = arith.constant 0 : index
    %0 = vector.load %arg1[%c0, %c0_0] : memref<9x128xf32, #tpu.memory_space<vmem>>, vector<9x128xf32>
    %1 = vector.extract_strided_slice %0 {offsets = [0, 0], sizes = [3, 128], strides = [1, 1]} : vector<9x128xf32> to vector<3x128xf32>
    %2 = vector.extract_strided_slice %0 {offsets = [3, 0], sizes = [3, 128], strides = [1, 1]} : vector<9x128xf32> to vector<3x128xf32>
    %3 = vector.extract_strided_slice %0 {offsets = [6, 0], sizes = [1, 128], strides = [1, 1]} : vector<9x128xf32> to vector<1x128xf32>
    %4 = vector.extract_strided_slice %0 {offsets = [7, 0], sizes = [1, 128], strides = [1, 1]} : vector<9x128xf32> to vector<1x128xf32>
    %5 = vector.extract_strided_slice %0 {offsets = [8, 0], sizes = [1, 128], strides = [1, 1]} : vector<9x128xf32> to vector<1x128xf32>
    %6 = arith.addf %4, %5 : vector<1x128xf32>
    %cst = arith.constant 5.000000e-01 : f32
    %7 = vector.broadcast %cst : f32 to vector<1x128xf32>
    %8 = arith.mulf %6, %7 : vector<1x128xf32>
    %9 = arith.subf %5, %4 : vector<1x128xf32>
    %cst_1 = arith.constant 5.000000e-01 : f32
    %10 = vector.broadcast %cst_1 : f32 to vector<1x128xf32>
    %11 = arith.mulf %9, %10 : vector<1x128xf32>
    %12 = arith.mulf %8, %8 : vector<1x128xf32>
    %13 = arith.mulf %11, %11 : vector<1x128xf32>
    %14 = arith.mulf %13, %13 : vector<1x128xf32>
    %cst_2 = arith.constant 3.000000e+00 : f32
    %15 = vector.broadcast %cst_2 : f32 to vector<1x128xf32>
    %16 = arith.mulf %15, %12 : vector<1x128xf32>
    %17 = arith.addf %16, %13 : vector<1x128xf32>
    %cst_3 = arith.constant 1.000000e-10 : f32
    %18 = vector.broadcast %cst_3 : f32 to vector<1x128xf32>
    %19 = arith.addf %17, %18 : vector<1x128xf32>
    %cst_4 = arith.constant 1.000000e+00 : f32
    %20 = vector.broadcast %cst_4 : f32 to vector<1x128xf32>
    %21 = arith.divf %20, %19 : vector<1x128xf32>
    %cst_5 = arith.constant 2.000000e+00 : f32
    %22 = vector.broadcast %cst_5 : f32 to vector<1x128xf32>
    %23 = arith.mulf %22, %8 : vector<1x128xf32>
    %24 = arith.mulf %23, %13 : vector<1x128xf32>
    %25 = arith.mulf %24, %21 : vector<1x128xf32>
    %26 = arith.addf %8, %25 : vector<1x128xf32>
    %cst_6 = arith.constant 3.000000e+00 : f32
    %27 = vector.broadcast %cst_6 : f32 to vector<1x128xf32>
    %28 = arith.divf %13, %27 : vector<1x128xf32>
    %cst_7 = arith.constant 1.200000e+01 : f32
    %29 = vector.broadcast %cst_7 : f32 to vector<1x128xf32>
    %30 = arith.mulf %29, %12 : vector<1x128xf32>
    %31 = arith.subf %30, %13 : vector<1x128xf32>
    %32 = arith.mulf %14, %31 : vector<1x128xf32>
    %33 = arith.mulf %21, %21 : vector<1x128xf32>
    %34 = arith.mulf %32, %33 : vector<1x128xf32>
    %cst_8 = arith.constant 0.266666681 : f32
    %35 = vector.broadcast %cst_8 : f32 to vector<1x128xf32>
    %36 = arith.mulf %35, %34 : vector<1x128xf32>
    %37 = arith.subf %28, %36 : vector<1x128xf32>
    %38 = arith.mulf %3, %3 : vector<1x128xf32>
    %cst_9 = arith.constant 4.000000e+00 : f32
    %39 = vector.broadcast %cst_9 : f32 to vector<1x128xf32>
    %40 = arith.divf %12, %39 : vector<1x128xf32>
    %cst_10 = arith.constant 0.416666657 : f32
    %41 = vector.broadcast %cst_10 : f32 to vector<1x128xf32>
    %42 = arith.mulf %41, %13 : vector<1x128xf32>
    %43 = arith.addf %40, %42 : vector<1x128xf32>
    %cst_11 = arith.constant 0.266666681 : f32
    %44 = vector.broadcast %cst_11 : f32 to vector<1x128xf32>
    %45 = arith.mulf %44, %14 : vector<1x128xf32>
    %46 = arith.mulf %45, %21 : vector<1x128xf32>
    %47 = arith.subf %43, %46 : vector<1x128xf32>
    %48 = arith.mulf %38, %47 : vector<1x128xf32>
    %49 = vector.broadcast %26 : vector<1x128xf32> to vector<3x128xf32>
    %50 = arith.mulf %49, %2 : vector<3x128xf32>
    %51 = arith.addf %1, %50 : vector<3x128xf32>
    %52 = arith.mulf %2, %2 : vector<3x128xf32>
    %53 = vector.extract_strided_slice %52 {offsets = [0, 0], sizes = [1, 128], strides = [1, 1]} : vector<3x128xf32> to vector<1x128xf32>
    %54 = vector.extract_strided_slice %52 {offsets = [1, 0], sizes = [1, 128], strides = [1, 1]} : vector<3x128xf32> to vector<1x128xf32>
    %55 = arith.addf %53, %54 : vector<1x128xf32>
    %56 = vector.extract_strided_slice %52 {offsets = [2, 0], sizes = [1, 128], strides = [1, 1]} : vector<3x128xf32> to vector<1x128xf32>
    %57 = arith.addf %55, %56 : vector<1x128xf32>
    %cst_12 = arith.constant 1.000000e-10 : f32
    %58 = vector.broadcast %cst_12 : f32 to vector<1x128xf32>
    %59 = arith.addf %57, %58 : vector<1x128xf32>
    %cst_13 = arith.constant 1.000000e+00 : f32
    %60 = vector.broadcast %cst_13 : f32 to vector<1x128xf32>
    %61 = arith.divf %60, %59 : vector<1x128xf32>
    %62 = vector.broadcast %37 : vector<1x128xf32> to vector<3x128xf32>
    %63 = arith.mulf %62, %52 : vector<3x128xf32>
    %64 = vector.broadcast %61 : vector<1x128xf32> to vector<3x128xf32>
    %65 = arith.mulf %52, %64 : vector<3x128xf32>
    %cst_14 = arith.constant 1.000000e+00 : f32
    %66 = vector.broadcast %cst_14 : f32 to vector<3x128xf32>
    %67 = arith.subf %66, %65 : vector<3x128xf32>
    %68 = vector.broadcast %48 : vector<1x128xf32> to vector<3x128xf32>
    %69 = arith.mulf %68, %67 : vector<3x128xf32>
    %70 = arith.addf %63, %69 : vector<3x128xf32>
    %cst_15 = arith.constant 9.765625E-4 : f32
    %71 = vector.broadcast %cst_15 : f32 to vector<3x128xf32>
    %72 = arith.mulf %51, %71 : vector<3x128xf32>
    %cst_16 = arith.constant 3.906250e-03 : f32
    %73 = vector.broadcast %cst_16 : f32 to vector<3x128xf32>
    %74 = arith.mulf %51, %73 : vector<3x128xf32>
    %cst_17 = arith.constant 1.562500e-02 : f32
    %75 = vector.broadcast %cst_17 : f32 to vector<3x128xf32>
    %76 = arith.mulf %51, %75 : vector<3x128xf32>
    %cst_18 = arith.constant 6.250000e-02 : f32
    %77 = vector.broadcast %cst_18 : f32 to vector<3x128xf32>
    %78 = arith.mulf %51, %77 : vector<3x128xf32>
    %cst_19 = arith.constant 2.500000e-01 : f32
    %79 = vector.broadcast %cst_19 : f32 to vector<3x128xf32>
    %80 = arith.mulf %51, %79 : vector<3x128xf32>
    %cst_20 = arith.constant 1.000000e+00 : f32
    %81 = vector.broadcast %cst_20 : f32 to vector<3x128xf32>
    %82 = arith.mulf %51, %81 : vector<3x128xf32>
    %cst_21 = arith.constant 4.000000e+00 : f32
    %83 = vector.broadcast %cst_21 : f32 to vector<3x128xf32>
    %84 = arith.mulf %51, %83 : vector<3x128xf32>
    %cst_22 = arith.constant 1.600000e+01 : f32
    %85 = vector.broadcast %cst_22 : f32 to vector<3x128xf32>
    %86 = arith.mulf %51, %85 : vector<3x128xf32>
    %cst_23 = arith.constant 6.400000e+01 : f32
    %87 = vector.broadcast %cst_23 : f32 to vector<3x128xf32>
    %88 = arith.mulf %51, %87 : vector<3x128xf32>
    %cst_24 = arith.constant 2.560000e+02 : f32
    %89 = vector.broadcast %cst_24 : f32 to vector<3x128xf32>
    %90 = arith.mulf %51, %89 : vector<3x128xf32>
    %91 = tpu.concatenate %72, %74, %76, %78, %80, %82, %84, %86, %88, %90 in 0 : vector<3x128xf32>, vector<3x128xf32>, vector<3x128xf32>, vector<3x128xf32>, vector<3x128xf32>, vector<3x128xf32>, vector<3x128xf32>, vector<3x128xf32>, vector<3x128xf32>, vector<3x128xf32> -> vector<30x128xf32>
    %cst_25 = arith.constant 9.765625E-4 : f32
    %92 = vector.broadcast %cst_25 : f32 to vector<3x128xf32>
    %93 = arith.mulf %70, %92 : vector<3x128xf32>
    %cst_26 = arith.constant 3.906250e-03 : f32
    %94 = vector.broadcast %cst_26 : f32 to vector<3x128xf32>
    %95 = arith.mulf %70, %94 : vector<3x128xf32>
    %cst_27 = arith.constant 1.562500e-02 : f32
    %96 = vector.broadcast %cst_27 : f32 to vector<3x128xf32>
    %97 = arith.mulf %70, %96 : vector<3x128xf32>
    %cst_28 = arith.constant 6.250000e-02 : f32
    %98 = vector.broadcast %cst_28 : f32 to vector<3x128xf32>
    %99 = arith.mulf %70, %98 : vector<3x128xf32>
    %cst_29 = arith.constant 2.500000e-01 : f32
    %100 = vector.broadcast %cst_29 : f32 to vector<3x128xf32>
    %101 = arith.mulf %70, %100 : vector<3x128xf32>
    %cst_30 = arith.constant 1.000000e+00 : f32
    %102 = vector.broadcast %cst_30 : f32 to vector<3x128xf32>
    %103 = arith.mulf %70, %102 : vector<3x128xf32>
    %cst_31 = arith.constant 4.000000e+00 : f32
    %104 = vector.broadcast %cst_31 : f32 to vector<3x128xf32>
    %105 = arith.mulf %70, %104 : vector<3x128xf32>
    %cst_32 = arith.constant 1.600000e+01 : f32
    %106 = vector.broadcast %cst_32 : f32 to vector<3x128xf32>
    %107 = arith.mulf %70, %106 : vector<3x128xf32>
    %cst_33 = arith.constant 6.400000e+01 : f32
    %108 = vector.broadcast %cst_33 : f32 to vector<3x128xf32>
    %109 = arith.mulf %70, %108 : vector<3x128xf32>
    %cst_34 = arith.constant 2.560000e+02 : f32
    %110 = vector.broadcast %cst_34 : f32 to vector<3x128xf32>
    %111 = arith.mulf %70, %110 : vector<3x128xf32>
    %112 = tpu.concatenate %93, %95, %97, %99, %101, %103, %105, %107, %109, %111 in 0 : vector<3x128xf32>, vector<3x128xf32>, vector<3x128xf32>, vector<3x128xf32>, vector<3x128xf32>, vector<3x128xf32>, vector<3x128xf32>, vector<3x128xf32>, vector<3x128xf32>, vector<3x128xf32> -> vector<30x128xf32>
    %cst_35 = arith.constant -5.000000e-01 : f32
    %113 = vector.broadcast %cst_35 : f32 to vector<30x128xf32>
    %114 = arith.mulf %113, %112 : vector<30x128xf32>
    %115 = math.exp %114 : vector<30x128xf32>
    %116 = math.sin %91 : vector<30x128xf32>
    %117 = arith.mulf %116, %115 : vector<30x128xf32>
    %c0_36 = arith.constant 0 : index
    %c0_37 = arith.constant 0 : index
    %c0_38 = arith.constant 0 : index
    %118 = vector.load %arg2[%c0_36, %c0_37, %c0_38] : memref<2x30x128xf32, #tpu.memory_space<vmem>>, vector<1x30x128xf32>
    %119 = vector.shape_cast %118 : vector<1x30x128xf32> to vector<30x128xf32>
    %120 = vector.shape_cast %117 : vector<30x128xf32> to vector<1x30x128xf32>
    tpu.vector_store %arg2[%c0_36, %c0_37, %c0_38], %120 {strides = array<i32>} : memref<2x30x128xf32, #tpu.memory_space<vmem>>, vector<1x30x128xf32>,
    %121 = math.cos %91 : vector<30x128xf32>
    %122 = arith.mulf %121, %115 : vector<30x128xf32>
    %c1 = arith.constant 1 : index
    %c0_39 = arith.constant 0 : index
    %c0_40 = arith.constant 0 : index
    %123 = vector.load %arg2[%c1, %c0_39, %c0_40] : memref<2x30x128xf32, #tpu.memory_space<vmem>>, vector<1x30x128xf32>
    %124 = vector.shape_cast %123 : vector<1x30x128xf32> to vector<30x128xf32>
    %125 = vector.shape_cast %122 : vector<30x128xf32> to vector<1x30x128xf32>
    tpu.vector_store %arg2[%c1, %c0_39, %c0_40], %125 {strides = array<i32>} : memref<2x30x128xf32, #tpu.memory_space<vmem>>, vector<1x30x128xf32>,
    return
  }
  func.func @transform_0(%arg0: i32) -> (i32, i32) {
    %c0_i32 = arith.constant 0 : i32
    %c0_i32_0 = arith.constant 0 : i32
    return %c0_i32, %arg0 : i32, i32
  }
  func.func @transform_1(%arg0: i32) -> (i32, i32, i32) {
    %c0_i32 = arith.constant 0 : i32
    %c0_i32_0 = arith.constant 0 : i32
    %c0_i32_1 = arith.constant 0 : i32
    return %c0_i32, %c0_i32_0, %arg0 : i32, i32, i32
  }
}

</mosaic_0001>

<llo_original>
// kernel: tpu_custom_call.1
$region0: #{tpu_custom_call.1}
  #allocation0 [shape = 'u32[]', space=smem, size = 0x4, offset = 0x4, fixed_abs, tag = 'smem constant byte address 0x4 - core index']
  #allocation1 [shape = 'u32[72,128]{1,0:T(1,128)}', space=vmem, size = 0x9000, scoped, tag = 'internal scratch']
  %s0 = inlined_call_operand.hbm [shape: f32[9,128], index: 0, kind: input, shape index: {}]
  %s1 = inlined_call_operand.vmem [shape: f32[2,30,128], index: 1, kind: output, shape index: {}]
  %s2 = sld [smem:[#allocation0]]
  $region18: #{tpu_custom_call.1} parent=0
    _
  %s4 = ssub.s32 1, %s2
  %s5 = scalar_select 0, %s4, %s2
  $region1: #{tpu_custom_call.1} parent=0
    #allocation2 [shape = 'u8[8192]{0}', space=vmem, size = 0x2000, scoped, tag = 'input window, operand 0, single buffered']
    #allocation3 [shape = 's32[1]{0}', space=sflag, size = 0x4, scoped, tag = 'scoped memory for tpu_custom_call.1']
    %6 = vsyncpa [#allocation3], 0
    // Predicated region
    $region2: #{tpu_custom_call.1} parent=1 // pred_check
      _
    $region3: #{tpu_custom_call.1} parent=1 // pred_check_branch
      %8 = sbr.rel (0) target = $region5
    $region4: #{tpu_custom_call.1} parent=1 // pred_region
      %10 = vsyncadd [#allocation3], 0
      %s11 = sshll.u32 %s0, 4
      %s12 = int_to_ptr.hbm [resolvable:$true] %s11
      %s13 = sshll.u32 [#allocation2], 4
      %s14 = int_to_ptr.vmem [resolvable:$true] %s13
      %19 = dma.hbm_to_vmem [thread:$0]  %s12, 256, %s14, [#allocation3], 128, 128, 8
    $region5: #{tpu_custom_call.1} parent=1 // pred_fallthru
      _
    // Predicated region
    $region6: #{tpu_custom_call.1} parent=1 // pred_check
      _
    $region7: #{tpu_custom_call.1} parent=1 // pred_check_branch
      %21 = sbr.rel (0) target = $region9
    $region8: #{tpu_custom_call.1} parent=1 // pred_region
      %23 = dma.done [#allocation3], 256
    $region9: #{tpu_custom_call.1} parent=1 // pred_fallthru
      _
    %v24 = vld [vmem:[#allocation2] sm:$0xff]
    %v25 = vld [vmem:[#allocation2 + $0x8] sm:$0x1]
    %v27 = vrot.slane %v25, 1
    %v29 = vadd.f32 %v24, %v27
    %v30 = vmul.f32 %v29, 0.5
    %v32 = vrot.slane %v24, 7
    %v34 = vsub.f32 %v25, %v32
    %v35 = vmul.f32 %v34, 0.5
    %v36 = vmul.f32 %v30, %v30
    %v37 = vmul.f32 %v35, %v35
    %v38 = vmul.f32 %v37, %v37
    %v39 = vmul.f32 %v36, 3.0
    %v41 = vrot.slane %v37, 1
    %v43 = vadd.f32 %v39, %v41
    %v44 = vadd.f32 %v43, 1e-10
    %v45 = vrcp.pop %v44
    %v46 = vmul.f32 %v44, %v45
    %v47 = vsub.f32 1.0, %v46
    %v48 = vmul.f32 %v45, %v47
    %v49 = vadd.f32 %v45, %v48
    %vm50 = vweird.f32 %v44
    %vm51 = vweird.f32 %v45
    %vm52 = vmor %vm50, %vm51
    %v53 = vsel %vm52, %v45, %v49
    %v54 = vand.u32 2147483647, %v44
    %vm55 = vcmp.eq.f32.partialorder %v54, 8.507059e+37
    %v56 = vand.u32 %v44, 2147483648
    %v57 = vor.u32 1.1754944e-38, %v56
    %v58 = vsel %vm55, %v57, %v53
    %v59 = vmul.f32 1.0, %v58
    %v60 = vmul.f32 %v30, 2.0
    %v61 = vmul.f32 %v60, %v41
    %v62 = vmul.f32 %v61, %v59
    %v63 = vadd.f32 %v30, %v62
    %v64 = vrcp.pop 3.0
    %v65 = vmul.f32 3.0, %v64
    %v66 = vsub.f32 1.0, %v65
    %v67 = vmul.f32 %v64, %v66
    %v68 = vadd.f32 %v64, %v67
    %vm69 = vweird.f32 %v64
    %v70 = vsel %vm69, %v64, %v68
    %v71 = vmul.f32 %v37, %v70
    %v72 = vmul.f32 %v36, 12.0
    %v73 = vsub.f32 %v72, %v41
    %v75 = vrot.slane %v73, 7
    %v77 = vmul.f32 %v38, %v75
    %v78 = vmul.f32 %v59, %v59
    %v80 = vrot.slane %v78, 7
    %v82 = vmul.f32 %v77, %v80
    %v83 = vmul.f32 %v82, 0.26666668
    %v84 = vsub.f32 %v71, %v83
    %v85 = vmul.f32 %v24, %v24
    %v86 = vrcp.pop 4.0
    %v87 = vmul.f32 4.0, %v86
    %v88 = vsub.f32 1.0, %v87
    %v89 = vmul.f32 %v86, %v88
    %v90 = vadd.f32 %v86, %v89
    %vm91 = vweird.f32 %v86
    %v92 = vsel %vm91, %v86, %v90
    %v93 = vmul.f32 %v36, %v92
    %v94 = vmul.f32 %v37, 0.41666666
    %v96 = vrot.slane %v94, 1
    %v98 = vadd.f32 %v93, %v96
    %v99 = vmul.f32 %v38, 0.26666668
    %v101 = vrot.slane %v59, 7
    %v103 = vmul.f32 %v99, %v101
    %v105 = vrot.slane %v103, 1
    %v107 = vsub.f32 %v98, %v105
    %v109 = vrot.slane %v107, 1
    %v111 = vmul.f32 %v85, %v109
    %v112 = vperm.slane %v63, 7
    %v113 = vmul.f32 %v112, %v24
    %v115 = vrot.slane %v113, 3
    %v117 = vadd.f32 %v24, %v115
    %v119 = vrot.slane %v85, 1
    %v121 = vadd.f32 %v85, %v119
    %v122 = vrot.slane %v85, 2
    %v124 = vadd.f32 %v121, %v122
    %v125 = vadd.f32 %v124, 1e-10
    %v126 = vrcp.pop %v125
    %v127 = vmul.f32 %v125, %v126
    %v128 = vsub.f32 1.0, %v127
    %v129 = vmul.f32 %v126, %v128
    %v130 = vadd.f32 %v126, %v129
    %vm131 = vweird.f32 %v125
    %vm132 = vweird.f32 %v126
    %vm133 = vmor %vm131, %vm132
    %v134 = vsel %vm133, %v126, %v130
    %v135 = vand.u32 2147483647, %v125
    %vm136 = vcmp.eq.f32.partialorder %v135, 8.507059e+37
    %v137 = vand.u32 %v125, 2147483648
    %v138 = vor.u32 1.1754944e-38, %v137
    %v139 = vsel %vm136, %v138, %v134
    %v140 = vmul.f32 1.0, %v139
    %v141 = vperm.slane %v84, 0
    %v142 = vmul.f32 %v141, %v85
    %v143 = vperm.slane %v140, 3
    %v144 = vmul.f32 %v85, %v143
    %v145 = vsub.f32 1.0, %v144
    %v146 = vperm.slane %v111, 6
    %v147 = vmul.f32 %v146, %v145
    %v148 = vadd.f32 %v142, %v147
    %v149 = vmul.f32 %v117, 0.0009765625
    %v150 = vmul.f32 %v117, 0.00390625
    %v151 = vmul.f32 %v117, 0.015625
    %v152 = vmul.f32 %v117, 0.0625
    %v153 = vmul.f32 %v117, 0.25
    %v154 = vmul.f32 %v117, 4.0
    %v155 = vmul.f32 %v117, 16.0
    %v156 = vmul.f32 %v117, 64.0
    %v157 = vmul.f32 %v117, 256.0
    %v159 = vrot.slane %v150, 5
    %v162 = vrot.slane %v151, 2
    %v165 = vrot.slane %v152, 7
    %v168 = vrot.slane %v153, 4
    %v171 = vrot.slane %v117, 1
    %v174 = vrot.slane %v154, 6
    %v177 = vrot.slane %v155, 3
    %v180 = vrot.slane %v157, 5
    %vm182 = vcmask 1042432
    %v183 = vsel %vm182, %v149, %v159
    %vm184 = vcmask 1045504
    %v185 = vsel %vm184, %v183, %v162
    %vm186 = vcmask 1040384
    %v187 = vsel %vm186, %v162, %v165
    %vm188 = vcmask 1043456
    %v189 = vsel %vm188, %v187, %v168
    %vm190 = vcmask 1046528
    %v191 = vsel %vm190, %v189, %v171
    %vm192 = vcmask 1041408
    %v193 = vsel %vm192, %v171, %v174
    %vm194 = vcmask 1044480
    %v195 = vsel %vm194, %v193, %v177
    %v196 = vsel %vm182, %v156, %v180
    %v197 = vmul.f32 %v148, 0.0009765625
    %v198 = vmul.f32 %v148, 0.00390625
    %v199 = vmul.f32 %v148, 0.015625
    %v200 = vmul.f32 %v148, 0.0625
    %v201 = vmul.f32 %v148, 0.25
    %v202 = vmul.f32 %v148, 4.0
    %v203 = vmul.f32 %v148, 16.0
    %v204 = vmul.f32 %v148, 64.0
    %v205 = vmul.f32 %v148, 256.0
    %v207 = vrot.slane %v197, 3
    %v210 = vrot.slane %v199, 5
    %v213 = vrot.slane %v200, 2
    %v216 = vrot.slane %v201, 7
    %v219 = vrot.slane %v148, 4
    %v222 = vrot.slane %v202, 1
    %v225 = vrot.slane %v203, 6
    %v228 = vrot.slane %v204, 3
    %v230 = vsel %vm182, %v207, %v198
    %v231 = vsel %vm184, %v230, %v210
    %v232 = vsel %vm186, %v210, %v213
    %v233 = vsel %vm188, %v232, %v216
    %v234 = vsel %vm190, %v233, %v219
    %v235 = vsel %vm192, %v219, %v222
    %v236 = vsel %vm194, %v235, %v225
    %v237 = vsel %vm182, %v228, %v205
    %v238 = vmul.f32 %v231, -0.5
    %v239 = vmul.f32 %v234, -0.5
    %v240 = vmul.f32 %v236, -0.5
    %v241 = vmul.f32 %v237, -0.5
    %v242 = vmul.f32 %v238, 1.442695
    %v243 = vpow.pop %v242
    %v244 = vmul.f32 %v239, 1.442695
    %v245 = vpow.pop %v244
    %v246 = vmul.f32 %v240, 1.442695
    %v247 = vpow.pop %v246
    %v248 = vmul.f32 %v241, 1.442695
    %v249 = vpow.pop %v248
    %v250 = vand.u32 2147483647, %v185
    %vm251 = vcmp.le.f32.partialorder %v250, 0.7853982
    %vm252 = vcmp.lt.s32.totalorder %v185, 0
    %v253 = vand.u32 %v185, 2139095040
    %v254 = vshrl.u32 %v253, 23
    %v255 = vsub.s32 %v254, 127
    %v256 = vand.u32 2147483647, %v185
    %v257 = vand.u32 %v256, 8388607
    %v258 = vor.u32 %v257, 8388608
    %v259 = vsub.s32 0, %v258
    %v260 = vadd.s32 %v255, 1
    %vm261 = vcmp.gt.s32.totalorder %v260, 0
    %v262 = vsel %vm261, %v260, 0
    %v263 = vshrl.u32 %v262, 5
    %v264 = vand.u32 %v262, 31
    %v265 = vsub.s32 32, %v264
    %v266 = vshrl.u32 683565275, %v265
    %v267 = vshll.u32 683565275, %v264
    %v268 = vshrl.u32 2475754826, %v265
    %v269 = vor.u32 %v267, %v268
    %v270 = vshll.u32 2475754826, %v264
    %v271 = vshrl.u32 2131351028, %v265
    %v272 = vor.u32 %v270, %v271
    %v273 = vshll.u32 2131351028, %v264
    %v274 = vshrl.u32 2102212464, %v265
    %v275 = vor.u32 %v273, %v274
    %v276 = vshll.u32 2102212464, %v264
    %v277 = vshrl.u32 920167782, %v265
    %v278 = vor.u32 %v276, %v277
    %v279 = vshll.u32 920167782, %v264
    %v280 = vshrl.u32 1326507024, %v265
    %v281 = vor.u32 %v279, %v280
    %vm282 = vcmp.lt.s32.totalorder %v263, 1
    %vm283 = vcmp.lt.s32.totalorder %v263, 2
    %vm284 = vcmp.lt.s32.totalorder %v263, 3
    %vm285 = vcmp.lt.s32.totalorder %v263, 4
    %v286 = vsel %vm282, %v266, %v269
    %v287 = vsel %vm285, %v275, 2102212464
    %v288 = vsel %vm284, %v272, %v287
    %v289 = vsel %vm283, %v286, %v288
    %v290 = vsel %vm282, %v269, %v272
    %v291 = vsel %vm285, %v278, 920167782
    %v292 = vsel %vm284, %v275, %v291
    %v293 = vsel %vm283, %v290, %v292
    %v294 = vsel %vm282, %v272, %v275
    %v295 = vsel %vm285, %v281, 1326507024
    %v296 = vsel %vm284, %v278, %v295
    %v297 = vsel %vm283, %v294, %v296
    %v298 = vshll.u32 %v258, 8
    %v299 = vand.u32 %v298, 65535
    %v300 = vshrl.u32 %v298, 16
    %v301 = vand.u32 %v297, 65535
    %v302 = vshrl.u32 %v297, 16
    %v303 = vmul.u32 %v299, %v301
    %v304 = vmul.u32 %v299, %v302
    %v305 = vmul.u32 %v300, %v301
    %v306 = vmul.u32 %v300, %v302
    %v307 = vshll.u32 %v304, 16
    %v308 = vshrl.u32 %v304, 16
    %v309 = vshll.u32 %v305, 16
    %v310 = vshrl.u32 %v305, 16
    %vm311 = vc.u32 %v303, %v307
    %v312 = vsel %vm311, 1, 0
    %v313 = vadd.s32 %v303, %v307
    %v314 = vadd.s32 %v306, %v312
    %vm315 = vc.u32 %v313, %v309
    %v316 = vsel %vm315, 1, 0
    %v317 = vadd.s32 %v313, %v309
    %v318 = vadd.s32 %v314, %v316
    %v319 = vadd.s32 %v318, %v308
    %v320 = vadd.s32 %v319, %v310
    %v321 = vand.u32 %v298, 65535
    %v322 = vshrl.u32 %v298, 16
    %v323 = vand.u32 %v293, 65535
    %v324 = vshrl.u32 %v293, 16
    %v325 = vmul.u32 %v321, %v323
    %v326 = vmul.u32 %v321, %v324
    %v327 = vmul.u32 %v322, %v323
    %v328 = vmul.u32 %v322, %v324
    %v329 = vshll.u32 %v326, 16
    %v330 = vshrl.u32 %v326, 16
    %v331 = vshll.u32 %v327, 16
    %v332 = vshrl.u32 %v327, 16
    %vm333 = vc.u32 %v325, %v329
    %v334 = vsel %vm333, 1, 0
    %v335 = vadd.s32 %v325, %v329
    %v336 = vadd.s32 %v328, %v334
    %vm337 = vc.u32 %v335, %v331
    %v338 = vsel %vm337, 1, 0
    %v339 = vadd.s32 %v335, %v331
    %v340 = vadd.s32 %v336, %v338
    %v341 = vadd.s32 %v340, %v330
    %v342 = vadd.s32 %v341, %v332
    %v343 = vmul.u32 %v298, %v289
    %v344 = vadd.s32 %v320, %v339
    %vm345 = vc.u32 %v320, %v339
    %v346 = vadd.s32 %v342, 1
    %v347 = vsel %vm345, %v346, %v342
    %v348 = vadd.s32 %v343, %v347
    %v349 = vadd.s32 %v348, 536870912
    %v350 = vshrl.u32 %v349, 30
    %v351 = vshll.u32 %v350, 30
    %v352 = vsub.s32 %v348, %v351
    %vm353 = vcmp.lt.s32.totalorder %v352, 0
    %v354 = vsub.s32 0, %v352
    %v355 = vsel %vm353, %v354, %v352
    %v356 = vclz %v355
    %v357 = vsub.s32 %v356, 2
    %vm358 = vcmp.gt.s32.totalorder 0, %v357
    %v359 = vsel %vm358, 0, %v357
    %v360 = vsub.s32 32, %v359
    %v361 = vshll.u32 %v352, %v359
    %v362 = vshrl.u32 %v344, %v360
    %v363 = vor.u32 %v361, %v362
    %v364 = vsub.s32 4294967266, %v359
    %v365 = vadd.s32 %v364, 127
    %v366 = vshll.u32 %v365, 23
    %v367 = vor.u32 4788187, %v366
    %v368 = vand.u32 2147483647, %v367
    %v370 = vcvt.s32.f32 %v363
    %v371 = vmul.f32 %v370, %v368
    %v372 = vxor.u32 %v371, 2147483648
    %v373 = vsel %vm252, %v372, %v371
    %v374 = vsub.s32 4, %v350
    %v375 = vsel %vm252, %v374, %v350
    %v376 = vsel %vm251, %v185, %v373
    %v377 = vsel %vm251, 0, %v375
    %v378 = vmul.f32 %v376, %v376
    %v379 = vmul.f32 %v378, -0.001358992
    %v380 = vadd.f32 %v379, 0.041655596
    %v381 = vmul.f32 %v378, %v380
    %v382 = vadd.f32 %v381, -0.4999988
    %v383 = vmul.f32 %v378, %v382
    %v384 = vadd.f32 1.0, %v383
    %v385 = vmul.f32 %v376, %v376
    %v386 = vmul.f32 %v385, -0.00019511016
    %v387 = vadd.f32 %v386, 0.008332121
    %v388 = vmul.f32 %v385, %v387
    %v389 = vadd.f32 %v388, -0.16666654
    %v390 = vmul.f32 %v385, %v389
    %v391 = vadd.f32 %v390, 1.0
    %v392 = vmul.f32 %v391, %v376
    %vm393 = vweird.f32 %v185
    %v394 = vadd.s32 %v377, 3
    %v395 = vand.u32 %v394, 3
    %vm396 = vcmp.lt.s32.totalorder %v395, 2
    %vm397 = vcmp.eq.s32.totalorder %v395, 0
    %v398 = vxor.u32 %v392, 2147483648
    %v399 = vsel %vm397, %v384, %v398
    %vm400 = vcmp.eq.s32.totalorder %v395, 2
    %v401 = vxor.u32 %v384, 2147483648
    %v402 = vsel %vm400, %v401, %v392
    %v403 = vsel %vm396, %v399, %v402
    %v404 = vsel %vm393, nan, %v403
    %v405 = vand.u32 2147483647, %v191
    %vm406 = vcmp.le.f32.partialorder %v405, 0.7853982
    %vm407 = vcmp.lt.s32.totalorder %v191, 0
    %v408 = vand.u32 %v191, 2139095040
    %v409 = vshrl.u32 %v408, 23
    %v410 = vsub.s32 %v409, 127
    %v411 = vand.u32 2147483647, %v191
    %v412 = vand.u32 %v411, 8388607
    %v413 = vor.u32 %v412, 8388608
    %v414 = vsub.s32 0, %v413
    %v415 = vadd.s32 %v410, 1
    %vm416 = vcmp.gt.s32.totalorder %v415, 0
    %v417 = vsel %vm416, %v415, 0
    %v418 = vshrl.u32 %v417, 5
    %v419 = vand.u32 %v417, 31
    %v420 = vsub.s32 32, %v419
    %v421 = vshrl.u32 683565275, %v420
    %v422 = vshll.u32 683565275, %v419
    %v423 = vshrl.u32 2475754826, %v420
    %v424 = vor.u32 %v422, %v423
    %v425 = vshll.u32 2475754826, %v419
    %v426 = vshrl.u32 2131351028, %v420
    %v427 = vor.u32 %v425, %v426
    %v428 = vshll.u32 2131351028, %v419
    %v429 = vshrl.u32 2102212464, %v420
    %v430 = vor.u32 %v428, %v429
    %v431 = vshll.u32 2102212464, %v419
    %v432 = vshrl.u32 920167782, %v420
    %v433 = vor.u32 %v431, %v432
    %v434 = vshll.u32 920167782, %v419
    %v435 = vshrl.u32 1326507024, %v420
    %v436 = vor.u32 %v434, %v435
    %vm437 = vcmp.lt.s32.totalorder %v418, 1
    %vm438 = vcmp.lt.s32.totalorder %v418, 2
    %vm439 = vcmp.lt.s32.totalorder %v418, 3
    %vm440 = vcmp.lt.s32.totalorder %v418, 4
    %v441 = vsel %vm437, %v421, %v424
    %v442 = vsel %vm440, %v430, 2102212464
    %v443 = vsel %vm439, %v427, %v442
    %v444 = vsel %vm438, %v441, %v443
    %v445 = vsel %vm437, %v424, %v427
    %v446 = vsel %vm440, %v433, 920167782
    %v447 = vsel %vm439, %v430, %v446
    %v448 = vsel %vm438, %v445, %v447
    %v449 = vsel %vm437, %v427, %v430
    %v450 = vsel %vm440, %v436, 1326507024
    %v451 = vsel %vm439, %v433, %v450
    %v452 = vsel %vm438, %v449, %v451
    %v453 = vshll.u32 %v413, 8
    %v454 = vand.u32 %v453, 65535
    %v455 = vshrl.u32 %v453, 16
    %v456 = vand.u32 %v452, 65535
    %v457 = vshrl.u32 %v452, 16
    %v458 = vmul.u32 %v454, %v456
    %v459 = vmul.u32 %v454, %v457
    %v460 = vmul.u32 %v455, %v456
    %v461 = vmul.u32 %v455, %v457
    %v462 = vshll.u32 %v459, 16
    %v463 = vshrl.u32 %v459, 16
    %v464 = vshll.u32 %v460, 16
    %v465 = vshrl.u32 %v460, 16
    %vm466 = vc.u32 %v458, %v462
    %v467 = vsel %vm466, 1, 0
    %v468 = vadd.s32 %v458, %v462
    %v469 = vadd.s32 %v461, %v467
    %vm470 = vc.u32 %v468, %v464
    %v471 = vsel %vm470, 1, 0
    %v472 = vadd.s32 %v468, %v464
    %v473 = vadd.s32 %v469, %v471
    %v474 = vadd.s32 %v473, %v463
    %v475 = vadd.s32 %v474, %v465
    %v476 = vand.u32 %v453, 65535
    %v477 = vshrl.u32 %v453, 16
    %v478 = vand.u32 %v448, 65535
    %v479 = vshrl.u32 %v448, 16
    %v480 = vmul.u32 %v476, %v478
    %v481 = vmul.u32 %v476, %v479
    %v482 = vmul.u32 %v477, %v478
    %v483 = vmul.u32 %v477, %v479
    %v484 = vshll.u32 %v481, 16
    %v485 = vshrl.u32 %v481, 16
    %v486 = vshll.u32 %v482, 16
    %v487 = vshrl.u32 %v482, 16
    %vm488 = vc.u32 %v480, %v484
    %v489 = vsel %vm488, 1, 0
    %v490 = vadd.s32 %v480, %v484
    %v491 = vadd.s32 %v483, %v489
    %vm492 = vc.u32 %v490, %v486
    %v493 = vsel %vm492, 1, 0
    %v494 = vadd.s32 %v490, %v486
    %v495 = vadd.s32 %v491, %v493
    %v496 = vadd.s32 %v495, %v485
    %v497 = vadd.s32 %v496, %v487
    %v498 = vmul.u32 %v453, %v444
    %v499 = vadd.s32 %v475, %v494
    %vm500 = vc.u32 %v475, %v494
    %v501 = vadd.s32 %v497, 1
    %v502 = vsel %vm500, %v501, %v497
    %v503 = vadd.s32 %v498, %v502
    %v504 = vadd.s32 %v503, 536870912
    %v505 = vshrl.u32 %v504, 30
    %v506 = vshll.u32 %v505, 30
    %v507 = vsub.s32 %v503, %v506
    %vm508 = vcmp.lt.s32.totalorder %v507, 0
    %v509 = vsub.s32 0, %v507
    %v510 = vsel %vm508, %v509, %v507
    %v511 = vclz %v510
    %v512 = vsub.s32 %v511, 2
    %vm513 = vcmp.gt.s32.totalorder 0, %v512
    %v514 = vsel %vm513, 0, %v512
    %v515 = vsub.s32 32, %v514
    %v516 = vshll.u32 %v507, %v514
    %v517 = vshrl.u32 %v499, %v515
    %v518 = vor.u32 %v516, %v517
    %v519 = vsub.s32 4294967266, %v514
    %v520 = vadd.s32 %v519, 127
    %v521 = vshll.u32 %v520, 23
    %v522 = vor.u32 4788187, %v521
    %v523 = vand.u32 2147483647, %v522
    %v525 = vcvt.s32.f32 %v518
    %v526 = vmul.f32 %v525, %v523
    %v527 = vxor.u32 %v526, 2147483648
    %v528 = vsel %vm407, %v527, %v526
    %v529 = vsub.s32 4, %v505
    %v530 = vsel %vm407, %v529, %v505
    %v531 = vsel %vm406, %v191, %v528
    %v532 = vsel %vm406, 0, %v530
    %v533 = vmul.f32 %v531, %v531
    %v534 = vmul.f32 %v533, -0.001358992
    %v535 = vadd.f32 %v534, 0.041655596
    %v536 = vmul.f32 %v533, %v535
    %v537 = vadd.f32 %v536, -0.4999988
    %v538 = vmul.f32 %v533, %v537
    %v539 = vadd.f32 1.0, %v538
    %v540 = vmul.f32 %v531, %v531
    %v541 = vmul.f32 %v540, -0.00019511016
    %v542 = vadd.f32 %v541, 0.008332121
    %v543 = vmul.f32 %v540, %v542
    %v544 = vadd.f32 %v543, -0.16666654
    %v545 = vmul.f32 %v540, %v544
    %v546 = vadd.f32 %v545, 1.0
    %v547 = vmul.f32 %v546, %v531
    %vm548 = vweird.f32 %v191
    %v549 = vadd.s32 %v532, 3
    %v550 = vand.u32 %v549, 3
    %vm551 = vcmp.lt.s32.totalorder %v550, 2
    %vm552 = vcmp.eq.s32.totalorder %v550, 0
    %v553 = vxor.u32 %v547, 2147483648
    %v554 = vsel %vm552, %v539, %v553
    %vm555 = vcmp.eq.s32.totalorder %v550, 2
    %v556 = vxor.u32 %v539, 2147483648
    %v557 = vsel %vm555, %v556, %v547
    %v558 = vsel %vm551, %v554, %v557
    %v559 = vsel %vm548, nan, %v558
    %v560 = vand.u32 2147483647, %v195
    %vm561 = vcmp.le.f32.partialorder %v560, 0.7853982
    %vm562 = vcmp.lt.s32.totalorder %v195, 0
    %v563 = vand.u32 %v195, 2139095040
    %v564 = vshrl.u32 %v563, 23
    %v565 = vsub.s32 %v564, 127
    %v566 = vand.u32 2147483647, %v195
    %v567 = vand.u32 %v566, 8388607
    %v568 = vor.u32 %v567, 8388608
    %v569 = vsub.s32 0, %v568
    %v570 = vadd.s32 %v565, 1
    %vm571 = vcmp.gt.s32.totalorder %v570, 0
    %v572 = vsel %vm571, %v570, 0
    %v573 = vshrl.u32 %v572, 5
    %v574 = vand.u32 %v572, 31
    %v575 = vsub.s32 32, %v574
    %v576 = vshrl.u32 683565275, %v575
    %v577 = vshll.u32 683565275, %v574
    %v578 = vshrl.u32 2475754826, %v575
    %v579 = vor.u32 %v577, %v578
    %v580 = vshll.u32 2475754826, %v574
    %v581 = vshrl.u32 2131351028, %v575
    %v582 = vor.u32 %v580, %v581
    %v583 = vshll.u32 2131351028, %v574
    %v584 = vshrl.u32 2102212464, %v575
    %v585 = vor.u32 %v583, %v584
    %v586 = vshll.u32 2102212464, %v574
    %v587 = vshrl.u32 920167782, %v575
    %v588 = vor.u32 %v586, %v587
    %v589 = vshll.u32 920167782, %v574
    %v590 = vshrl.u32 1326507024, %v575
    %v591 = vor.u32 %v589, %v590
    %vm592 = vcmp.lt.s32.totalorder %v573, 1
    %vm593 = vcmp.lt.s32.totalorder %v573, 2
    %vm594 = vcmp.lt.s32.totalorder %v573, 3
    %vm595 = vcmp.lt.s32.totalorder %v573, 4
    %v596 = vsel %vm592, %v576, %v579
    %v597 = vsel %vm595, %v585, 2102212464
    %v598 = vsel %vm594, %v582, %v597
    %v599 = vsel %vm593, %v596, %v598
    %v600 = vsel %vm592, %v579, %v582
    %v601 = vsel %vm595, %v588, 920167782
    %v602 = vsel %vm594, %v585, %v601
    %v603 = vsel %vm593, %v600, %v602
    %v604 = vsel %vm592, %v582, %v585
    %v605 = vsel %vm595, %v591, 1326507024
    %v606 = vsel %vm594, %v588, %v605
    %v607 = vsel %vm593, %v604, %v606
    %v608 = vshll.u32 %v568, 8
    %v609 = vand.u32 %v608, 65535
    %v610 = vshrl.u32 %v608, 16
    %v611 = vand.u32 %v607, 65535
    %v612 = vshrl.u32 %v607, 16
    %v613 = vmul.u32 %v609, %v611
    %v614 = vmul.u32 %v609, %v612
    %v615 = vmul.u32 %v610, %v611
    %v616 = vmul.u32 %v610, %v612
    %v617 = vshll.u32 %v614, 16
    %v618 = vshrl.u32 %v614, 16
    %v619 = vshll.u32 %v615, 16
    %v620 = vshrl.u32 %v615, 16
    %vm621 = vc.u32 %v613, %v617
    %v622 = vsel %vm621, 1, 0
    %v623 = vadd.s32 %v613, %v617
    %v624 = vadd.s32 %v616, %v622
    %vm625 = vc.u32 %v623, %v619
    %v626 = vsel %vm625, 1, 0
    %v627 = vadd.s32 %v623, %v619
    %v628 = vadd.s32 %v624, %v626
    %v629 = vadd.s32 %v628, %v618
    %v630 = vadd.s32 %v629, %v620
    %v631 = vand.u32 %v608, 65535
    %v632 = vshrl.u32 %v608, 16
    %v633 = vand.u32 %v603, 65535
    %v634 = vshrl.u32 %v603, 16
    %v635 = vmul.u32 %v631, %v633
    %v636 = vmul.u32 %v631, %v634
    %v637 = vmul.u32 %v632, %v633
    %v638 = vmul.u32 %v632, %v634
    %v639 = vshll.u32 %v636, 16
    %v640 = vshrl.u32 %v636, 16
    %v641 = vshll.u32 %v637, 16
    %v642 = vshrl.u32 %v637, 16
    %vm643 = vc.u32 %v635, %v639
    %v644 = vsel %vm643, 1, 0
    %v645 = vadd.s32 %v635, %v639
    %v646 = vadd.s32 %v638, %v644
    %vm647 = vc.u32 %v645, %v641
    %v648 = vsel %vm647, 1, 0
    %v649 = vadd.s32 %v645, %v641
    %v650 = vadd.s32 %v646, %v648
    %v651 = vadd.s32 %v650, %v640
    %v652 = vadd.s32 %v651, %v642
    %v653 = vmul.u32 %v608, %v599
    %v654 = vadd.s32 %v630, %v649
    %vm655 = vc.u32 %v630, %v649
    %v656 = vadd.s32 %v652, 1
    %v657 = vsel %vm655, %v656, %v652
    %v658 = vadd.s32 %v653, %v657
    %v659 = vadd.s32 %v658, 536870912
    %v660 = vshrl.u32 %v659, 30
    %v661 = vshll.u32 %v660, 30
    %v662 = vsub.s32 %v658, %v661
    %vm663 = vcmp.lt.s32.totalorder %v662, 0
    %v664 = vsub.s32 0, %v662
    %v665 = vsel %vm663, %v664, %v662
    %v666 = vclz %v665
    %v667 = vsub.s32 %v666, 2
    %vm668 = vcmp.gt.s32.totalorder 0, %v667
    %v669 = vsel %vm668, 0, %v667
    %v670 = vsub.s32 32, %v669
    %v671 = vshll.u32 %v662, %v669
    %v672 = vshrl.u32 %v654, %v670
    %v673 = vor.u32 %v671, %v672
    %v674 = vsub.s32 4294967266, %v669
    %v675 = vadd.s32 %v674, 127
    %v676 = vshll.u32 %v675, 23
    %v677 = vor.u32 4788187, %v676
    %v678 = vand.u32 2147483647, %v677
    %v680 = vcvt.s32.f32 %v673
    %v681 = vmul.f32 %v680, %v678
    %v682 = vxor.u32 %v681, 2147483648
    %v683 = vsel %vm562, %v682, %v681
    %v684 = vsub.s32 4, %v660
    %v685 = vsel %vm562, %v684, %v660
    %v686 = vsel %vm561, %v195, %v683
    %v687 = vsel %vm561, 0, %v685
    %v688 = vmul.f32 %v686, %v686
    %v689 = vmul.f32 %v688, -0.001358992
    %v690 = vadd.f32 %v689, 0.041655596
    %v691 = vmul.f32 %v688, %v690
    %v692 = vadd.f32 %v691, -0.4999988
    %v693 = vmul.f32 %v688, %v692
    %v694 = vadd.f32 1.0, %v693
    %v695 = vmul.f32 %v686, %v686
    %v696 = vmul.f32 %v695, -0.00019511016
    %v697 = vadd.f32 %v696, 0.008332121
    %v698 = vmul.f32 %v695, %v697
    %v699 = vadd.f32 %v698, -0.16666654
    %v700 = vmul.f32 %v695, %v699
    %v701 = vadd.f32 %v700, 1.0
    %v702 = vmul.f32 %v701, %v686
    %vm703 = vweird.f32 %v195
    %v704 = vadd.s32 %v687, 3
    %v705 = vand.u32 %v704, 3
    %vm706 = vcmp.lt.s32.totalorder %v705, 2
    %vm707 = vcmp.eq.s32.totalorder %v705, 0
    %v708 = vxor.u32 %v702, 2147483648
    %v709 = vsel %vm707, %v694, %v708
    %vm710 = vcmp.eq.s32.totalorder %v705, 2
    %v711 = vxor.u32 %v694, 2147483648
    %v712 = vsel %vm710, %v711, %v702
    %v713 = vsel %vm706, %v709, %v712
    %v714 = vsel %vm703, nan, %v713
    %v715 = vand.u32 2147483647, %v196
    %vm716 = vcmp.le.f32.partialorder %v715, 0.7853982
    %vm717 = vcmp.lt.s32.totalorder %v196, 0
    %v718 = vand.u32 %v196, 2139095040
    %v719 = vshrl.u32 %v718, 23
    %v720 = vsub.s32 %v719, 127
    %v721 = vand.u32 2147483647, %v196
    %v722 = vand.u32 %v721, 8388607
    %v723 = vor.u32 %v722, 8388608
    %v724 = vsub.s32 0, %v723
    %v725 = vadd.s32 %v720, 1
    %vm726 = vcmp.gt.s32.totalorder %v725, 0
    %v727 = vsel %vm726, %v725, 0
    %v728 = vshrl.u32 %v727, 5
    %v729 = vand.u32 %v727, 31
    %v730 = vsub.s32 32, %v729
    %v731 = vshrl.u32 683565275, %v730
    %v732 = vshll.u32 683565275, %v729
    %v733 = vshrl.u32 2475754826, %v730
    %v734 = vor.u32 %v732, %v733
    %v735 = vshll.u32 2475754826, %v729
    %v736 = vshrl.u32 2131351028, %v730
    %v737 = vor.u32 %v735, %v736
    %v738 = vshll.u32 2131351028, %v729
    %v739 = vshrl.u32 2102212464, %v730
    %v740 = vor.u32 %v738, %v739
    %v741 = vshll.u32 2102212464, %v729
    %v742 = vshrl.u32 920167782, %v730
    %v743 = vor.u32 %v741, %v742
    %v744 = vshll.u32 920167782, %v729
    %v745 = vshrl.u32 1326507024, %v730
    %v746 = vor.u32 %v744, %v745
    %vm747 = vcmp.lt.s32.totalorder %v728, 1
    %vm748 = vcmp.lt.s32.totalorder %v728, 2
    %vm749 = vcmp.lt.s32.totalorder %v728, 3
    %vm750 = vcmp.lt.s32.totalorder %v728, 4
    %v751 = vsel %vm747, %v731, %v734
    %v752 = vsel %vm750, %v740, 2102212464
    %v753 = vsel %vm749, %v737, %v752
    %v754 = vsel %vm748, %v751, %v753
    %v755 = vsel %vm747, %v734, %v737
    %v756 = vsel %vm750, %v743, 920167782
    %v757 = vsel %vm749, %v740, %v756
    %v758 = vsel %vm748, %v755, %v757
    %v759 = vsel %vm747, %v737, %v740
    %v760 = vsel %vm750, %v746, 1326507024
    %v761 = vsel %vm749, %v743, %v760
    %v762 = vsel %vm748, %v759, %v761
    %v763 = vshll.u32 %v723, 8
    %v764 = vand.u32 %v763, 65535
    %v765 = vshrl.u32 %v763, 16
    %v766 = vand.u32 %v762, 65535
    %v767 = vshrl.u32 %v762, 16
    %v768 = vmul.u32 %v764, %v766
    %v769 = vmul.u32 %v764, %v767
    %v770 = vmul.u32 %v765, %v766
    %v771 = vmul.u32 %v765, %v767
    %v772 = vshll.u32 %v769, 16
    %v773 = vshrl.u32 %v769, 16
    %v774 = vshll.u32 %v770, 16
    %v775 = vshrl.u32 %v770, 16
    %vm776 = vc.u32 %v768, %v772
    %v777 = vsel %vm776, 1, 0
    %v778 = vadd.s32 %v768, %v772
    %v779 = vadd.s32 %v771, %v777
    %vm780 = vc.u32 %v778, %v774
    %v781 = vsel %vm780, 1, 0
    %v782 = vadd.s32 %v778, %v774
    %v783 = vadd.s32 %v779, %v781
    %v784 = vadd.s32 %v783, %v773
    %v785 = vadd.s32 %v784, %v775
    %v786 = vand.u32 %v763, 65535
    %v787 = vshrl.u32 %v763, 16
    %v788 = vand.u32 %v758, 65535
    %v789 = vshrl.u32 %v758, 16
    %v790 = vmul.u32 %v786, %v788
    %v791 = vmul.u32 %v786, %v789
    %v792 = vmul.u32 %v787, %v788
    %v793 = vmul.u32 %v787, %v789
    %v794 = vshll.u32 %v791, 16
    %v795 = vshrl.u32 %v791, 16
    %v796 = vshll.u32 %v792, 16
    %v797 = vshrl.u32 %v792, 16
    %vm798 = vc.u32 %v790, %v794
    %v799 = vsel %vm798, 1, 0
    %v800 = vadd.s32 %v790, %v794
    %v801 = vadd.s32 %v793, %v799
    %vm802 = vc.u32 %v800, %v796
    %v803 = vsel %vm802, 1, 0
    %v804 = vadd.s32 %v800, %v796
    %v805 = vadd.s32 %v801, %v803
    %v806 = vadd.s32 %v805, %v795
    %v807 = vadd.s32 %v806, %v797
    %v808 = vmul.u32 %v763, %v754
    %v809 = vadd.s32 %v785, %v804
    %vm810 = vc.u32 %v785, %v804
    %v811 = vadd.s32 %v807, 1
    %v812 = vsel %vm810, %v811, %v807
    %v813 = vadd.s32 %v808, %v812
    %v814 = vadd.s32 %v813, 536870912
    %v815 = vshrl.u32 %v814, 30
    %v816 = vshll.u32 %v815, 30
    %v817 = vsub.s32 %v813, %v816
    %vm818 = vcmp.lt.s32.totalorder %v817, 0
    %v819 = vsub.s32 0, %v817
    %v820 = vsel %vm818, %v819, %v817
    %v821 = vclz %v820
    %v822 = vsub.s32 %v821, 2
    %vm823 = vcmp.gt.s32.totalorder 0, %v822
    %v824 = vsel %vm823, 0, %v822
    %v825 = vsub.s32 32, %v824
    %v826 = vshll.u32 %v817, %v824
    %v827 = vshrl.u32 %v809, %v825
    %v828 = vor.u32 %v826, %v827
    %v829 = vsub.s32 4294967266, %v824
    %v830 = vadd.s32 %v829, 127
    %v831 = vshll.u32 %v830, 23
    %v832 = vor.u32 4788187, %v831
    %v833 = vand.u32 2147483647, %v832
    %v835 = vcvt.s32.f32 %v828
    %v836 = vmul.f32 %v835, %v833
    %v837 = vxor.u32 %v836, 2147483648
    %v838 = vsel %vm717, %v837, %v836
    %v839 = vsub.s32 4, %v815
    %v840 = vsel %vm717, %v839, %v815
    %v841 = vsel %vm716, %v196, %v838
    %v842 = vsel %vm716, 0, %v840
    %v843 = vmul.f32 %v841, %v841
    %v844 = vmul.f32 %v843, -0.001358992
    %v845 = vadd.f32 %v844, 0.041655596
    %v846 = vmul.f32 %v843, %v845
    %v847 = vadd.f32 %v846, -0.4999988
    %v848 = vmul.f32 %v843, %v847
    %v849 = vadd.f32 1.0, %v848
    %v850 = vmul.f32 %v841, %v841
    %v851 = vmul.f32 %v850, -0.00019511016
    %v852 = vadd.f32 %v851, 0.008332121
    %v853 = vmul.f32 %v850, %v852
    %v854 = vadd.f32 %v853, -0.16666654
    %v855 = vmul.f32 %v850, %v854
    %v856 = vadd.f32 %v855, 1.0
    %v857 = vmul.f32 %v856, %v841
    %vm858 = vweird.f32 %v196
    %v859 = vadd.s32 %v842, 3
    %v860 = vand.u32 %v859, 3
    %vm861 = vcmp.lt.s32.totalorder %v860, 2
    %vm862 = vcmp.eq.s32.totalorder %v860, 0
    %v863 = vxor.u32 %v857, 2147483648
    %v864 = vsel %vm862, %v849, %v863
    %vm865 = vcmp.eq.s32.totalorder %v860, 2
    %v866 = vxor.u32 %v849, 2147483648
    %v867 = vsel %vm865, %v866, %v857
    %v868 = vsel %vm861, %v864, %v867
    %v869 = vsel %vm858, nan, %v868
    %v870 = vmul.f32 %v404, %v243
    %v871 = vmul.f32 %v559, %v245
    %v872 = vmul.f32 %v714, %v247
    %v873 = vmul.f32 %v869, %v249
    %874 = vst [vmem:[%s1] sm:$0xff] %v870
    %875 = vst [vmem:[%s1 + $0x8] sm:$0xff] %v871
    %876 = vst [vmem:[%s1 + $0x10] sm:$0xff] %v872
    %877 = vst [vmem:[%s1 + $0x18] sm:$0x3f] %v873
    %v878 = vand.u32 2147483647, %v185
    %vm879 = vcmp.le.f32.partialorder %v878, 0.7853982
    %vm880 = vcmp.lt.s32.totalorder %v185, 0
    %v881 = vand.u32 %v185, 2139095040
    %v882 = vshrl.u32 %v881, 23
    %v883 = vsub.s32 %v882, 127
    %v884 = vand.u32 2147483647, %v185
    %v885 = vand.u32 %v884, 8388607
    %v886 = vor.u32 %v885, 8388608
    %v887 = vsub.s32 0, %v886
    %v888 = vadd.s32 %v883, 1
    %vm889 = vcmp.gt.s32.totalorder %v888, 0
    %v890 = vsel %vm889, %v888, 0
    %v891 = vshrl.u32 %v890, 5
    %v892 = vand.u32 %v890, 31
    %v893 = vsub.s32 32, %v892
    %v894 = vshrl.u32 683565275, %v893
    %v895 = vshll.u32 683565275, %v892
    %v896 = vshrl.u32 2475754826, %v893
    %v897 = vor.u32 %v895, %v896
    %v898 = vshll.u32 2475754826, %v892
    %v899 = vshrl.u32 2131351028, %v893
    %v900 = vor.u32 %v898, %v899
    %v901 = vshll.u32 2131351028, %v892
    %v902 = vshrl.u32 2102212464, %v893
    %v903 = vor.u32 %v901, %v902
    %v904 = vshll.u32 2102212464, %v892
    %v905 = vshrl.u32 920167782, %v893
    %v906 = vor.u32 %v904, %v905
    %v907 = vshll.u32 920167782, %v892
    %v908 = vshrl.u32 1326507024, %v893
    %v909 = vor.u32 %v907, %v908
    %vm910 = vcmp.lt.s32.totalorder %v891, 1
    %vm911 = vcmp.lt.s32.totalorder %v891, 2
    %vm912 = vcmp.lt.s32.totalorder %v891, 3
    %vm913 = vcmp.lt.s32.totalorder %v891, 4
    %v914 = vsel %vm910, %v894, %v897
    %v915 = vsel %vm913, %v903, 2102212464
    %v916 = vsel %vm912, %v900, %v915
    %v917 = vsel %vm911, %v914, %v916
    %v918 = vsel %vm910, %v897, %v900
    %v919 = vsel %vm913, %v906, 920167782
    %v920 = vsel %vm912, %v903, %v919
    %v921 = vsel %vm911, %v918, %v920
    %v922 = vsel %vm910, %v900, %v903
    %v923 = vsel %vm913, %v909, 1326507024
    %v924 = vsel %vm912, %v906, %v923
    %v925 = vsel %vm911, %v922, %v924
    %v926 = vshll.u32 %v886, 8
    %v927 = vand.u32 %v926, 65535
    %v928 = vshrl.u32 %v926, 16
    %v929 = vand.u32 %v925, 65535
    %v930 = vshrl.u32 %v925, 16
    %v931 = vmul.u32 %v927, %v929
    %v932 = vmul.u32 %v927, %v930
    %v933 = vmul.u32 %v928, %v929
    %v934 = vmul.u32 %v928, %v930
    %v935 = vshll.u32 %v932, 16
    %v936 = vshrl.u32 %v932, 16
    %v937 = vshll.u32 %v933, 16
    %v938 = vshrl.u32 %v933, 16
    %vm939 = vc.u32 %v931, %v935
    %v940 = vsel %vm939, 1, 0
    %v941 = vadd.s32 %v931, %v935
    %v942 = vadd.s32 %v934, %v940
    %vm943 = vc.u32 %v941, %v937
    %v944 = vsel %vm943, 1, 0
    %v945 = vadd.s32 %v941, %v937
    %v946 = vadd.s32 %v942, %v944
    %v947 = vadd.s32 %v946, %v936
    %v948 = vadd.s32 %v947, %v938
    %v949 = vand.u32 %v926, 65535
    %v950 = vshrl.u32 %v926, 16
    %v951 = vand.u32 %v921, 65535
    %v952 = vshrl.u32 %v921, 16
    %v953 = vmul.u32 %v949, %v951
    %v954 = vmul.u32 %v949, %v952
    %v955 = vmul.u32 %v950, %v951
    %v956 = vmul.u32 %v950, %v952
    %v957 = vshll.u32 %v954, 16
    %v958 = vshrl.u32 %v954, 16
    %v959 = vshll.u32 %v955, 16
    %v960 = vshrl.u32 %v955, 16
    %vm961 = vc.u32 %v953, %v957
    %v962 = vsel %vm961, 1, 0
    %v963 = vadd.s32 %v953, %v957
    %v964 = vadd.s32 %v956, %v962
    %vm965 = vc.u32 %v963, %v959
    %v966 = vsel %vm965, 1, 0
    %v967 = vadd.s32 %v963, %v959
    %v968 = vadd.s32 %v964, %v966
    %v969 = vadd.s32 %v968, %v958
    %v970 = vadd.s32 %v969, %v960
    %v971 = vmul.u32 %v926, %v917
    %v972 = vadd.s32 %v948, %v967
    %vm973 = vc.u32 %v948, %v967
    %v974 = vadd.s32 %v970, 1
    %v975 = vsel %vm973, %v974, %v970
    %v976 = vadd.s32 %v971, %v975
    %v977 = vadd.s32 %v976, 536870912
    %v978 = vshrl.u32 %v977, 30
    %v979 = vshll.u32 %v978, 30
    %v980 = vsub.s32 %v976, %v979
    %vm981 = vcmp.lt.s32.totalorder %v980, 0
    %v982 = vsub.s32 0, %v980
    %v983 = vsel %vm981, %v982, %v980
    %v984 = vclz %v983
    %v985 = vsub.s32 %v984, 2
    %vm986 = vcmp.gt.s32.totalorder 0, %v985
    %v987 = vsel %vm986, 0, %v985
    %v988 = vsub.s32 32, %v987
    %v989 = vshll.u32 %v980, %v987
    %v990 = vshrl.u32 %v972, %v988
    %v991 = vor.u32 %v989, %v990
    %v992 = vsub.s32 4294967266, %v987
    %v993 = vadd.s32 %v992, 127
    %v994 = vshll.u32 %v993, 23
    %v995 = vor.u32 4788187, %v994
    %v996 = vand.u32 2147483647, %v995
    %v998 = vcvt.s32.f32 %v991
    %v999 = vmul.f32 %v998, %v996
    %v1000 = vxor.u32 %v999, 2147483648
    %v1001 = vsel %vm880, %v1000, %v999
    %v1002 = vsub.s32 4, %v978
    %v1003 = vsel %vm880, %v1002, %v978
    %v1004 = vsel %vm879, %v185, %v1001
    %v1005 = vsel %vm879, 0, %v1003
    %v1006 = vmul.f32 %v1004, %v1004
    %v1007 = vmul.f32 %v1006, -0.001358992
    %v1008 = vadd.f32 %v1007, 0.041655596
    %v1009 = vmul.f32 %v1006, %v1008
    %v1010 = vadd.f32 %v1009, -0.4999988
    %v1011 = vmul.f32 %v1006, %v1010
    %v1012 = vadd.f32 1.0, %v1011
    %v1013 = vmul.f32 %v1004, %v1004
    %v1014 = vmul.f32 %v1013, -0.00019511016
    %v1015 = vadd.f32 %v1014, 0.008332121
    %v1016 = vmul.f32 %v1013, %v1015
    %v1017 = vadd.f32 %v1016, -0.16666654
    %v1018 = vmul.f32 %v1013, %v1017
    %v1019 = vadd.f32 %v1018, 1.0
    %v1020 = vmul.f32 %v1019, %v1004
    %vm1021 = vweird.f32 %v185
    %v1022 = vand.u32 %v1005, 3
    %vm1023 = vcmp.lt.s32.totalorder %v1022, 2
    %vm1024 = vcmp.eq.s32.totalorder %v1022, 0
    %v1025 = vxor.u32 %v1020, 2147483648
    %v1026 = vsel %vm1024, %v1012, %v1025
    %vm1027 = vcmp.eq.s32.totalorder %v1022, 2
    %v1028 = vxor.u32 %v1012, 2147483648
    %v1029 = vsel %vm1027, %v1028, %v1020
    %v1030 = vsel %vm1023, %v1026, %v1029
    %v1031 = vsel %vm1021, nan, %v1030
    %v1032 = vand.u32 2147483647, %v191
    %vm1033 = vcmp.le.f32.partialorder %v1032, 0.7853982
    %vm1034 = vcmp.lt.s32.totalorder %v191, 0
    %v1035 = vand.u32 %v191, 2139095040
    %v1036 = vshrl.u32 %v1035, 23
    %v1037 = vsub.s32 %v1036, 127
    %v1038 = vand.u32 2147483647, %v191
    %v1039 = vand.u32 %v1038, 8388607
    %v1040 = vor.u32 %v1039, 8388608
    %v1041 = vsub.s32 0, %v1040
    %v1042 = vadd.s32 %v1037, 1
    %vm1043 = vcmp.gt.s32.totalorder %v1042, 0
    %v1044 = vsel %vm1043, %v1042, 0
    %v1045 = vshrl.u32 %v1044, 5
    %v1046 = vand.u32 %v1044, 31
    %v1047 = vsub.s32 32, %v1046
    %v1048 = vshrl.u32 683565275, %v1047
    %v1049 = vshll.u32 683565275, %v1046
    %v1050 = vshrl.u32 2475754826, %v1047
    %v1051 = vor.u32 %v1049, %v1050
    %v1052 = vshll.u32 2475754826, %v1046
    %v1053 = vshrl.u32 2131351028, %v1047
    %v1054 = vor.u32 %v1052, %v1053
    %v1055 = vshll.u32 2131351028, %v1046
    %v1056 = vshrl.u32 2102212464, %v1047
    %v1057 = vor.u32 %v1055, %v1056
    %v1058 = vshll.u32 2102212464, %v1046
    %v1059 = vshrl.u32 920167782, %v1047
    %v1060 = vor.u32 %v1058, %v1059
    %v1061 = vshll.u32 920167782, %v1046
    %v1062 = vshrl.u32 1326507024, %v1047
    %v1063 = vor.u32 %v1061, %v1062
    %vm1064 = vcmp.lt.s32.totalorder %v1045, 1
    %vm1065 = vcmp.lt.s32.totalorder %v1045, 2
    %vm1066 = vcmp.lt.s32.totalorder %v1045, 3
    %vm1067 = vcmp.lt.s32.totalorder %v1045, 4
    %v1068 = vsel %vm1064, %v1048, %v1051
    %v1069 = vsel %vm1067, %v1057, 2102212464
    %v1070 = vsel %vm1066, %v1054, %v1069
    %v1071 = vsel %vm1065, %v1068, %v1070
    %v1072 = vsel %vm1064, %v1051, %v1054
    %v1073 = vsel %vm1067, %v1060, 920167782
    %v1074 = vsel %vm1066, %v1057, %v1073
    %v1075 = vsel %vm1065, %v1072, %v1074
    %v1076 = vsel %vm1064, %v1054, %v1057
    %v1077 = vsel %vm1067, %v1063, 1326507024
    %v1078 = vsel %vm1066, %v1060, %v1077
    %v1079 = vsel %vm1065, %v1076, %v1078
    %v1080 = vshll.u32 %v1040, 8
    %v1081 = vand.u32 %v1080, 65535
    %v1082 = vshrl.u32 %v1080, 16
    %v1083 = vand.u32 %v1079, 65535
    %v1084 = vshrl.u32 %v1079, 16
    %v1085 = vmul.u32 %v1081, %v1083
    %v1086 = vmul.u32 %v1081, %v1084
    %v1087 = vmul.u32 %v1082, %v1083
    %v1088 = vmul.u32 %v1082, %v1084
    %v1089 = vshll.u32 %v1086, 16
    %v1090 = vshrl.u32 %v1086, 16
    %v1091 = vshll.u32 %v1087, 16
    %v1092 = vshrl.u32 %v1087, 16
    %vm1093 = vc.u32 %v1085, %v1089
    %v1094 = vsel %vm1093, 1, 0
    %v1095 = vadd.s32 %v1085, %v1089
    %v1096 = vadd.s32 %v1088, %v1094
    %vm1097 = vc.u32 %v1095, %v1091
    %v1098 = vsel %vm1097, 1, 0
    %v1099 = vadd.s32 %v1095, %v1091
    %v1100 = vadd.s32 %v1096, %v1098
    %v1101 = vadd.s32 %v1100, %v1090
    %v1102 = vadd.s32 %v1101, %v1092
    %v1103 = vand.u32 %v1080, 65535
    %v1104 = vshrl.u32 %v1080, 16
    %v1105 = vand.u32 %v1075, 65535
    %v1106 = vshrl.u32 %v1075, 16
    %v1107 = vmul.u32 %v1103, %v1105
    %v1108 = vmul.u32 %v1103, %v1106
    %v1109 = vmul.u32 %v1104, %v1105
    %v1110 = vmul.u32 %v1104, %v1106
    %v1111 = vshll.u32 %v1108, 16
    %v1112 = vshrl.u32 %v1108, 16
    %v1113 = vshll.u32 %v1109, 16
    %v1114 = vshrl.u32 %v1109, 16
    %vm1115 = vc.u32 %v1107, %v1111
    %v1116 = vsel %vm1115, 1, 0
    %v1117 = vadd.s32 %v1107, %v1111
    %v1118 = vadd.s32 %v1110, %v1116
    %vm1119 = vc.u32 %v1117, %v1113
    %v1120 = vsel %vm1119, 1, 0
    %v1121 = vadd.s32 %v1117, %v1113
    %v1122 = vadd.s32 %v1118, %v1120
    %v1123 = vadd.s32 %v1122, %v1112
    %v1124 = vadd.s32 %v1123, %v1114
    %v1125 = vmul.u32 %v1080, %v1071
    %v1126 = vadd.s32 %v1102, %v1121
    %vm1127 = vc.u32 %v1102, %v1121
    %v1128 = vadd.s32 %v1124, 1
    %v1129 = vsel %vm1127, %v1128, %v1124
    %v1130 = vadd.s32 %v1125, %v1129
    %v1131 = vadd.s32 %v1130, 536870912
    %v1132 = vshrl.u32 %v1131, 30
    %v1133 = vshll.u32 %v1132, 30
    %v1134 = vsub.s32 %v1130, %v1133
    %vm1135 = vcmp.lt.s32.totalorder %v1134, 0
    %v1136 = vsub.s32 0, %v1134
    %v1137 = vsel %vm1135, %v1136, %v1134
    %v1138 = vclz %v1137
    %v1139 = vsub.s32 %v1138, 2
    %vm1140 = vcmp.gt.s32.totalorder 0, %v1139
    %v1141 = vsel %vm1140, 0, %v1139
    %v1142 = vsub.s32 32, %v1141
    %v1143 = vshll.u32 %v1134, %v1141
    %v1144 = vshrl.u32 %v1126, %v1142
    %v1145 = vor.u32 %v1143, %v1144
    %v1146 = vsub.s32 4294967266, %v1141
    %v1147 = vadd.s32 %v1146, 127
    %v1148 = vshll.u32 %v1147, 23
    %v1149 = vor.u32 4788187, %v1148
    %v1150 = vand.u32 2147483647, %v1149
    %v1152 = vcvt.s32.f32 %v1145
    %v1153 = vmul.f32 %v1152, %v1150
    %v1154 = vxor.u32 %v1153, 2147483648
    %v1155 = vsel %vm1034, %v1154, %v1153
    %v1156 = vsub.s32 4, %v1132
    %v1157 = vsel %vm1034, %v1156, %v1132
    %v1158 = vsel %vm1033, %v191, %v1155
    %v1159 = vsel %vm1033, 0, %v1157
    %v1160 = vmul.f32 %v1158, %v1158
    %v1161 = vmul.f32 %v1160, -0.001358992
    %v1162 = vadd.f32 %v1161, 0.041655596
    %v1163 = vmul.f32 %v1160, %v1162
    %v1164 = vadd.f32 %v1163, -0.4999988
    %v1165 = vmul.f32 %v1160, %v1164
    %v1166 = vadd.f32 1.0, %v1165
    %v1167 = vmul.f32 %v1158, %v1158
    %v1168 = vmul.f32 %v1167, -0.00019511016
    %v1169 = vadd.f32 %v1168, 0.008332121
    %v1170 = vmul.f32 %v1167, %v1169
    %v1171 = vadd.f32 %v1170, -0.16666654
    %v1172 = vmul.f32 %v1167, %v1171
    %v1173 = vadd.f32 %v1172, 1.0
    %v1174 = vmul.f32 %v1173, %v1158
    %vm1175 = vweird.f32 %v191
    %v1176 = vand.u32 %v1159, 3
    %vm1177 = vcmp.lt.s32.totalorder %v1176, 2
    %vm1178 = vcmp.eq.s32.totalorder %v1176, 0
    %v1179 = vxor.u32 %v1174, 2147483648
    %v1180 = vsel %vm1178, %v1166, %v1179
    %vm1181 = vcmp.eq.s32.totalorder %v1176, 2
    %v1182 = vxor.u32 %v1166, 2147483648
    %v1183 = vsel %vm1181, %v1182, %v1174
    %v1184 = vsel %vm1177, %v1180, %v1183
    %v1185 = vsel %vm1175, nan, %v1184
    %v1186 = vand.u32 2147483647, %v195
    %vm1187 = vcmp.le.f32.partialorder %v1186, 0.7853982
    %vm1188 = vcmp.lt.s32.totalorder %v195, 0
    %v1189 = vand.u32 %v195, 2139095040
    %v1190 = vshrl.u32 %v1189, 23
    %v1191 = vsub.s32 %v1190, 127
    %v1192 = vand.u32 2147483647, %v195
    %v1193 = vand.u32 %v1192, 8388607
    %v1194 = vor.u32 %v1193, 8388608
    %v1195 = vsub.s32 0, %v1194
    %v1196 = vadd.s32 %v1191, 1
    %vm1197 = vcmp.gt.s32.totalorder %v1196, 0
    %v1198 = vsel %vm1197, %v1196, 0
    %v1199 = vshrl.u32 %v1198, 5
    %v1200 = vand.u32 %v1198, 31
    %v1201 = vsub.s32 32, %v1200
    %v1202 = vshrl.u32 683565275, %v1201
    %v1203 = vshll.u32 683565275, %v1200
    %v1204 = vshrl.u32 2475754826, %v1201
    %v1205 = vor.u32 %v1203, %v1204
    %v1206 = vshll.u32 2475754826, %v1200
    %v1207 = vshrl.u32 2131351028, %v1201
    %v1208 = vor.u32 %v1206, %v1207
    %v1209 = vshll.u32 2131351028, %v1200
    %v1210 = vshrl.u32 2102212464, %v1201
    %v1211 = vor.u32 %v1209, %v1210
    %v1212 = vshll.u32 2102212464, %v1200
    %v1213 = vshrl.u32 920167782, %v1201
    %v1214 = vor.u32 %v1212, %v1213
    %v1215 = vshll.u32 920167782, %v1200
    %v1216 = vshrl.u32 1326507024, %v1201
    %v1217 = vor.u32 %v1215, %v1216
    %vm1218 = vcmp.lt.s32.totalorder %v1199, 1
    %vm1219 = vcmp.lt.s32.totalorder %v1199, 2
    %vm1220 = vcmp.lt.s32.totalorder %v1199, 3
    %vm1221 = vcmp.lt.s32.totalorder %v1199, 4
    %v1222 = vsel %vm1218, %v1202, %v1205
    %v1223 = vsel %vm1221, %v1211, 2102212464
    %v1224 = vsel %vm1220, %v1208, %v1223
    %v1225 = vsel %vm1219, %v1222, %v1224
    %v1226 = vsel %vm1218, %v1205, %v1208
    %v1227 = vsel %vm1221, %v1214, 920167782
    %v1228 = vsel %vm1220, %v1211, %v1227
    %v1229 = vsel %vm1219, %v1226, %v1228
    %v1230 = vsel %vm1218, %v1208, %v1211
    %v1231 = vsel %vm1221, %v1217, 1326507024
    %v1232 = vsel %vm1220, %v1214, %v1231
    %v1233 = vsel %vm1219, %v1230, %v1232
    %v1234 = vshll.u32 %v1194, 8
    %v1235 = vand.u32 %v1234, 65535
    %v1236 = vshrl.u32 %v1234, 16
    %v1237 = vand.u32 %v1233, 65535
    %v1238 = vshrl.u32 %v1233, 16
    %v1239 = vmul.u32 %v1235, %v1237
    %v1240 = vmul.u32 %v1235, %v1238
    %v1241 = vmul.u32 %v1236, %v1237
    %v1242 = vmul.u32 %v1236, %v1238
    %v1243 = vshll.u32 %v1240, 16
    %v1244 = vshrl.u32 %v1240, 16
    %v1245 = vshll.u32 %v1241, 16
    %v1246 = vshrl.u32 %v1241, 16
    %vm1247 = vc.u32 %v1239, %v1243
    %v1248 = vsel %vm1247, 1, 0
    %v1249 = vadd.s32 %v1239, %v1243
    %v1250 = vadd.s32 %v1242, %v1248
    %vm1251 = vc.u32 %v1249, %v1245
    %v1252 = vsel %vm1251, 1, 0
    %v1253 = vadd.s32 %v1249, %v1245
    %v1254 = vadd.s32 %v1250, %v1252
    %v1255 = vadd.s32 %v1254, %v1244
    %v1256 = vadd.s32 %v1255, %v1246
    %v1257 = vand.u32 %v1234, 65535
    %v1258 = vshrl.u32 %v1234, 16
    %v1259 = vand.u32 %v1229, 65535
    %v1260 = vshrl.u32 %v1229, 16
    %v1261 = vmul.u32 %v1257, %v1259
    %v1262 = vmul.u32 %v1257, %v1260
    %v1263 = vmul.u32 %v1258, %v1259
    %v1264 = vmul.u32 %v1258, %v1260
    %v1265 = vshll.u32 %v1262, 16
    %v1266 = vshrl.u32 %v1262, 16
    %v1267 = vshll.u32 %v1263, 16
    %v1268 = vshrl.u32 %v1263, 16
    %vm1269 = vc.u32 %v1261, %v1265
    %v1270 = vsel %vm1269, 1, 0
    %v1271 = vadd.s32 %v1261, %v1265
    %v1272 = vadd.s32 %v1264, %v1270
    %vm1273 = vc.u32 %v1271, %v1267
    %v1274 = vsel %vm1273, 1, 0
    %v1275 = vadd.s32 %v1271, %v1267
    %v1276 = vadd.s32 %v1272, %v1274
    %v1277 = vadd.s32 %v1276, %v1266
    %v1278 = vadd.s32 %v1277, %v1268
    %v1279 = vmul.u32 %v1234, %v1225
    %v1280 = vadd.s32 %v1256, %v1275
    %vm1281 = vc.u32 %v1256, %v1275
    %v1282 = vadd.s32 %v1278, 1
    %v1283 = vsel %vm1281, %v1282, %v1278
    %v1284 = vadd.s32 %v1279, %v1283
    %v1285 = vadd.s32 %v1284, 536870912
    %v1286 = vshrl.u32 %v1285, 30
    %v1287 = vshll.u32 %v1286, 30
    %v1288 = vsub.s32 %v1284, %v1287
    %vm1289 = vcmp.lt.s32.totalorder %v1288, 0
    %v1290 = vsub.s32 0, %v1288
    %v1291 = vsel %vm1289, %v1290, %v1288
    %v1292 = vclz %v1291
    %v1293 = vsub.s32 %v1292, 2
    %vm1294 = vcmp.gt.s32.totalorder 0, %v1293
    %v1295 = vsel %vm1294, 0, %v1293
    %v1296 = vsub.s32 32, %v1295
    %v1297 = vshll.u32 %v1288, %v1295
    %v1298 = vshrl.u32 %v1280, %v1296
    %v1299 = vor.u32 %v1297, %v1298
    %v1300 = vsub.s32 4294967266, %v1295
    %v1301 = vadd.s32 %v1300, 127
    %v1302 = vshll.u32 %v1301, 23
    %v1303 = vor.u32 4788187, %v1302
    %v1304 = vand.u32 2147483647, %v1303
    %v1306 = vcvt.s32.f32 %v1299
    %v1307 = vmul.f32 %v1306, %v1304
    %v1308 = vxor.u32 %v1307, 2147483648
    %v1309 = vsel %vm1188, %v1308, %v1307
    %v1310 = vsub.s32 4, %v1286
    %v1311 = vsel %vm1188, %v1310, %v1286
    %v1312 = vsel %vm1187, %v195, %v1309
    %v1313 = vsel %vm1187, 0, %v1311
    %v1314 = vmul.f32 %v1312, %v1312
    %v1315 = vmul.f32 %v1314, -0.001358992
    %v1316 = vadd.f32 %v1315, 0.041655596
    %v1317 = vmul.f32 %v1314, %v1316
    %v1318 = vadd.f32 %v1317, -0.4999988
    %v1319 = vmul.f32 %v1314, %v1318
    %v1320 = vadd.f32 1.0, %v1319
    %v1321 = vmul.f32 %v1312, %v1312
    %v1322 = vmul.f32 %v1321, -0.00019511016
    %v1323 = vadd.f32 %v1322, 0.008332121
    %v1324 = vmul.f32 %v1321, %v1323
    %v1325 = vadd.f32 %v1324, -0.16666654
    %v1326 = vmul.f32 %v1321, %v1325
    %v1327 = vadd.f32 %v1326, 1.0
    %v1328 = vmul.f32 %v1327, %v1312
    %vm1329 = vweird.f32 %v195
    %v1330 = vand.u32 %v1313, 3
    %vm1331 = vcmp.lt.s32.totalorder %v1330, 2
    %vm1332 = vcmp.eq.s32.totalorder %v1330, 0
    %v1333 = vxor.u32 %v1328, 2147483648
    %v1334 = vsel %vm1332, %v1320, %v1333
    %vm1335 = vcmp.eq.s32.totalorder %v1330, 2
    %v1336 = vxor.u32 %v1320, 2147483648
    %v1337 = vsel %vm1335, %v1336, %v1328
    %v1338 = vsel %vm1331, %v1334, %v1337
    %v1339 = vsel %vm1329, nan, %v1338
    %v1340 = vand.u32 2147483647, %v196
    %vm1341 = vcmp.le.f32.partialorder %v1340, 0.7853982
    %vm1342 = vcmp.lt.s32.totalorder %v196, 0
    %v1343 = vand.u32 %v196, 2139095040
    %v1344 = vshrl.u32 %v1343, 23
    %v1345 = vsub.s32 %v1344, 127
    %v1346 = vand.u32 2147483647, %v196
    %v1347 = vand.u32 %v1346, 8388607
    %v1348 = vor.u32 %v1347, 8388608
    %v1349 = vsub.s32 0, %v1348
    %v1350 = vadd.s32 %v1345, 1
    %vm1351 = vcmp.gt.s32.totalorder %v1350, 0
    %v1352 = vsel %vm1351, %v1350, 0
    %v1353 = vshrl.u32 %v1352, 5
    %v1354 = vand.u32 %v1352, 31
    %v1355 = vsub.s32 32, %v1354
    %v1356 = vshrl.u32 683565275, %v1355
    %v1357 = vshll.u32 683565275, %v1354
    %v1358 = vshrl.u32 2475754826, %v1355
    %v1359 = vor.u32 %v1357, %v1358
    %v1360 = vshll.u32 2475754826, %v1354
    %v1361 = vshrl.u32 2131351028, %v1355
    %v1362 = vor.u32 %v1360, %v1361
    %v1363 = vshll.u32 2131351028, %v1354
    %v1364 = vshrl.u32 2102212464, %v1355
    %v1365 = vor.u32 %v1363, %v1364
    %v1366 = vshll.u32 2102212464, %v1354
    %v1367 = vshrl.u32 920167782, %v1355
    %v1368 = vor.u32 %v1366, %v1367
    %v1369 = vshll.u32 920167782, %v1354
    %v1370 = vshrl.u32 1326507024, %v1355
    %v1371 = vor.u32 %v1369, %v1370
    %vm1372 = vcmp.lt.s32.totalorder %v1353, 1
    %vm1373 = vcmp.lt.s32.totalorder %v1353, 2
    %vm1374 = vcmp.lt.s32.totalorder %v1353, 3
    %vm1375 = vcmp.lt.s32.totalorder %v1353, 4
    %v1376 = vsel %vm1372, %v1356, %v1359
    %v1377 = vsel %vm1375, %v1365, 2102212464
    %v1378 = vsel %vm1374, %v1362, %v1377
    %v1379 = vsel %vm1373, %v1376, %v1378
    %v1380 = vsel %vm1372, %v1359, %v1362
    %v1381 = vsel %vm1375, %v1368, 920167782
    %v1382 = vsel %vm1374, %v1365, %v1381
    %v1383 = vsel %vm1373, %v1380, %v1382
    %v1384 = vsel %vm1372, %v1362, %v1365
    %v1385 = vsel %vm1375, %v1371, 1326507024
    %v1386 = vsel %vm1374, %v1368, %v1385
    %v1387 = vsel %vm1373, %v1384, %v1386
    %v1388 = vshll.u32 %v1348, 8
    %v1389 = vand.u32 %v1388, 65535
    %v1390 = vshrl.u32 %v1388, 16
    %v1391 = vand.u32 %v1387, 65535
    %v1392 = vshrl.u32 %v1387, 16
    %v1393 = vmul.u32 %v1389, %v1391
    %v1394 = vmul.u32 %v1389, %v1392
    %v1395 = vmul.u32 %v1390, %v1391
    %v1396 = vmul.u32 %v1390, %v1392
    %v1397 = vshll.u32 %v1394, 16
    %v1398 = vshrl.u32 %v1394, 16
    %v1399 = vshll.u32 %v1395, 16
    %v1400 = vshrl.u32 %v1395, 16
    %vm1401 = vc.u32 %v1393, %v1397
    %v1402 = vsel %vm1401, 1, 0
    %v1403 = vadd.s32 %v1393, %v1397
    %v1404 = vadd.s32 %v1396, %v1402
    %vm1405 = vc.u32 %v1403, %v1399
    %v1406 = vsel %vm1405, 1, 0
    %v1407 = vadd.s32 %v1403, %v1399
    %v1408 = vadd.s32 %v1404, %v1406
    %v1409 = vadd.s32 %v1408, %v1398
    %v1410 = vadd.s32 %v1409, %v1400
    %v1411 = vand.u32 %v1388, 65535
    %v1412 = vshrl.u32 %v1388, 16
    %v1413 = vand.u32 %v1383, 65535
    %v1414 = vshrl.u32 %v1383, 16
    %v1415 = vmul.u32 %v1411, %v1413
    %v1416 = vmul.u32 %v1411, %v1414
    %v1417 = vmul.u32 %v1412, %v1413
    %v1418 = vmul.u32 %v1412, %v1414
    %v1419 = vshll.u32 %v1416, 16
    %v1420 = vshrl.u32 %v1416, 16
    %v1421 = vshll.u32 %v1417, 16
    %v1422 = vshrl.u32 %v1417, 16
    %vm1423 = vc.u32 %v1415, %v1419
    %v1424 = vsel %vm1423, 1, 0
    %v1425 = vadd.s32 %v1415, %v1419
    %v1426 = vadd.s32 %v1418, %v1424
    %vm1427 = vc.u32 %v1425, %v1421
    %v1428 = vsel %vm1427, 1, 0
    %v1429 = vadd.s32 %v1425, %v1421
    %v1430 = vadd.s32 %v1426, %v1428
    %v1431 = vadd.s32 %v1430, %v1420
    %v1432 = vadd.s32 %v1431, %v1422
    %v1433 = vmul.u32 %v1388, %v1379
    %v1434 = vadd.s32 %v1410, %v1429
    %vm1435 = vc.u32 %v1410, %v1429
    %v1436 = vadd.s32 %v1432, 1
    %v1437 = vsel %vm1435, %v1436, %v1432
    %v1438 = vadd.s32 %v1433, %v1437
    %v1439 = vadd.s32 %v1438, 536870912
    %v1440 = vshrl.u32 %v1439, 30
    %v1441 = vshll.u32 %v1440, 30
    %v1442 = vsub.s32 %v1438, %v1441
    %vm1443 = vcmp.lt.s32.totalorder %v1442, 0
    %v1444 = vsub.s32 0, %v1442
    %v1445 = vsel %vm1443, %v1444, %v1442
    %v1446 = vclz %v1445
    %v1447 = vsub.s32 %v1446, 2
    %vm1448 = vcmp.gt.s32.totalorder 0, %v1447
    %v1449 = vsel %vm1448, 0, %v1447
    %v1450 = vsub.s32 32, %v1449
    %v1451 = vshll.u32 %v1442, %v1449
    %v1452 = vshrl.u32 %v1434, %v1450
    %v1453 = vor.u32 %v1451, %v1452
    %v1454 = vsub.s32 4294967266, %v1449
    %v1455 = vadd.s32 %v1454, 127
    %v1456 = vshll.u32 %v1455, 23
    %v1457 = vor.u32 4788187, %v1456
    %v1458 = vand.u32 2147483647, %v1457
    %v1460 = vcvt.s32.f32 %v1453
    %v1461 = vmul.f32 %v1460, %v1458
    %v1462 = vxor.u32 %v1461, 2147483648
    %v1463 = vsel %vm1342, %v1462, %v1461
    %v1464 = vsub.s32 4, %v1440
    %v1465 = vsel %vm1342, %v1464, %v1440
    %v1466 = vsel %vm1341, %v196, %v1463
    %v1467 = vsel %vm1341, 0, %v1465
    %v1468 = vmul.f32 %v1466, %v1466
    %v1469 = vmul.f32 %v1468, -0.001358992
    %v1470 = vadd.f32 %v1469, 0.041655596
    %v1471 = vmul.f32 %v1468, %v1470
    %v1472 = vadd.f32 %v1471, -0.4999988
    %v1473 = vmul.f32 %v1468, %v1472
    %v1474 = vadd.f32 1.0, %v1473
    %v1475 = vmul.f32 %v1466, %v1466
    %v1476 = vmul.f32 %v1475, -0.00019511016
    %v1477 = vadd.f32 %v1476, 0.008332121
    %v1478 = vmul.f32 %v1475, %v1477
    %v1479 = vadd.f32 %v1478, -0.16666654
    %v1480 = vmul.f32 %v1475, %v1479
    %v1481 = vadd.f32 %v1480, 1.0
    %v1482 = vmul.f32 %v1481, %v1466
    %vm1483 = vweird.f32 %v196
    %v1484 = vand.u32 %v1467, 3
    %vm1485 = vcmp.lt.s32.totalorder %v1484, 2
    %vm1486 = vcmp.eq.s32.totalorder %v1484, 0
    %v1487 = vxor.u32 %v1482, 2147483648
    %v1488 = vsel %vm1486, %v1474, %v1487
    %vm1489 = vcmp.eq.s32.totalorder %v1484, 2
    %v1490 = vxor.u32 %v1474, 2147483648
    %v1491 = vsel %vm1489, %v1490, %v1482
    %v1492 = vsel %vm1485, %v1488, %v1491
    %v1493 = vsel %vm1483, nan, %v1492
    %v1494 = vmul.f32 %v1031, %v243
    %v1495 = vmul.f32 %v1185, %v245
    %v1496 = vmul.f32 %v1339, %v247
    %v1497 = vmul.f32 %v1493, %v249
    %s1498 = scalar_lea.vmem %s1, 32
    %1499 = vst [vmem:[%s1498] sm:$0xff] %v1494
    %1500 = vst [vmem:[%s1498 + $0x8] sm:$0xff] %v1495
    %1501 = vst [vmem:[%s1498 + $0x10] sm:$0xff] %v1496
    %1502 = vst [vmem:[%s1498 + $0x18] sm:$0x3f] %v1497
    // Predicated region
    $region10: #{tpu_custom_call.1} parent=1 // pred_check
      _
    $region11: #{tpu_custom_call.1} parent=1 // pred_check_branch
      %1504 = sbr.rel (0) target = $region13
    $region12: #{tpu_custom_call.1} parent=1 // pred_region
      _
    $region13: #{tpu_custom_call.1} parent=1 // pred_fallthru
      _
    // Predicated region
    $region14: #{tpu_custom_call.1} parent=1 // pred_check
      _
    $region15: #{tpu_custom_call.1} parent=1 // pred_check_branch
      %1506 = sbr.rel (0) target = $region17
    $region16: #{tpu_custom_call.1} parent=1 // pred_region
      _
    $region17: #{tpu_custom_call.1} parent=1 // pred_fallthru
      _
    %1507 = vsyncpa [#allocation3], 1

</llo_original>
